<compile_context>
chip_gen: v6e
topology: v6e:2x2x1
jax: 0.10.0
libtpu: 0.0.40
codegen_flags: <defaults>
</compile_context>

<pallas_src>
import functools

import jax
import jax.numpy as jnp
from jax import lax
from jax.experimental import pallas as pl
from jax.experimental.pallas import tpu as pltpu


def _round_up(x, m):
    return ((x + m - 1) // m) * m


def _usable_vmem_bytes():
    """~85% of per-core VMEM (128 MiB v5e/v6e, 64 MiB v7x); safe fallback."""
    try:
        cap = getattr(pltpu.get_tpu_info(), "vmem_capacity_bytes", None)
        if cap:
            return int(0.85 * int(cap))
    except Exception:
        pass
    return int(0.85 * (64 << 20))


# --------------------------------------------------------------------------
# Kernel 1: fused single-layer LSTM over the whole (time-major) sequence for
# one 8-row batch tile.  Weights resident once; (h, c) carried in vregs.
# --------------------------------------------------------------------------
def _lstm_seq_kernel(x_ref, wih_t_ref, whh_t_ref, b_ref, h_out_ref, xw_ref, *,
                     seq_len, hidden_pad, batch_tile):
    Hp, Bt, T = hidden_pad, batch_tile, seq_len

    # ---- Prologue (hoisted out of the recurrence) -------------------------
    # One matmul over all T steps: xw = x @ W_ih^T + bias, stored to scratch.
    E = x_ref.shape[-1]
    x2 = x_ref[...].reshape(T * Bt, E)                               # bf16
    xw_ref[...] = (jnp.dot(x2, wih_t_ref[...],
                           preferred_element_type=jnp.float32)
                   + b_ref[...])                                     # f32 [T*Bt, 4Hp]

    w_hh_t = whh_t_ref[...]                                          # [Hp, 4Hp] bf16

    def step(t, carry):
        h_bf, c = carry                                # bf16 [Bt,Hp], f32 [Bt,Hp]
        row = pl.multiple_of(t * Bt, Bt)
        gates = (xw_ref[pl.ds(row, Bt), :]
                 + jnp.dot(h_bf, w_hh_t, preferred_element_type=jnp.float32))

        # Gate order permuted to (i, f, o, g) at padding time:
        # one contiguous sigmoid over 3*Hp lanes, one tanh over the last Hp.
        sig = jax.nn.sigmoid(gates[:, :3 * Hp])
        i_g = sig[:, 0 * Hp:1 * Hp]
        f_g = sig[:, 1 * Hp:2 * Hp]
        o_g = sig[:, 2 * Hp:3 * Hp]
        g_g = jnp.tanh(gates[:, 3 * Hp:4 * Hp])

        c_new = f_g * c + i_g * g_g
        h_new = o_g * jnp.tanh(c_new)                  # f32
        h_out_ref[t] = h_new                           # dense (8,128) f32 store
        return h_new.astype(jnp.bfloat16), c_new       # single bf16 cast / step

    carry0 = (jnp.zeros((Bt, Hp), jnp.bfloat16),       # nn.LSTM zero initial state
              jnp.zeros((Bt, Hp), jnp.float32))
    lax.fori_loop(0, T, step, carry0, unroll=True if T <= 32 else 4)


# --------------------------------------------------------------------------
# Kernel 2: batched output projection  logits = h @ W_lin^T + b_lin,
# tiled over (vocab columns, rows); rows innermost so W stays resident.
# --------------------------------------------------------------------------
def _proj_kernel(h_ref, w_ref, b_ref, out_ref):
    h_bf = h_ref[...].astype(jnp.bfloat16)
    out_ref[...] = (jnp.dot(h_bf, w_ref[...],
                            preferred_element_type=jnp.float32)
                    + b_ref[...]).astype(out_ref.dtype)


def decoder_rnn_forward(features, captions, params):
    """features: [B, E] f32, captions: [B, Tc] int32. Returns [B, Tc, V] f32."""
    embed_tbl = params["embed"]          # [V, E]
    w_ih = params["w_ih"]                # [4H, E]  (PyTorch gate order i,f,g,o)
    w_hh = params["w_hh"]                # [4H, H]
    b_ih = params["b_ih"]                # [4H]
    b_hh = params["b_hh"]                # [4H]
    w_lin = params["w_lin"]              # [V, H]
    b_lin = params["b_lin"]              # [V]

    B, E = features.shape
    H = w_hh.shape[1]
    V = w_lin.shape[0]

    # --- glue: embedding lookup + concat features as step 0 (plain JAX) ----
    cap_emb = embed_tbl[captions[:, :-1]]                          # [B, Tc-1, E]
    x = jnp.concatenate([features[:, None, :], cap_emb], axis=1)   # [B, T, E]
    T = x.shape[1]

    # --- padding: batch -> multiple of 8 sublanes, hidden -> multiple of 128.
    # Zero-padded weight rows / bias give pre-activation 0 on padded hidden
    # lanes, so with zero initial (h, c) the padded lanes stay exactly 0, and
    # the zero-padded W_hh rows keep them out of the real gates.
    Bp = _round_up(B, 8)
    Hp = _round_up(H, 128)
    BT = 8                               # batch tile (sublane-aligned)
    grid_b = Bp // BT

    x_p = jnp.pad(x, ((0, Bp - B), (0, 0), (0, 0)))
    x_tm = jnp.transpose(x_p, (1, 0, 2)).astype(jnp.bfloat16)      # [T, Bp, E]

    # Gate permutation (i, f, g, o) -> (i, f, o, g): sigmoid gates contiguous.
    gate_perm = jnp.array([0, 1, 3, 2], dtype=jnp.int32)

    def pad_gates(w):  # [4H, D] -> [4Hp, D]: permute gates, zero-pad each block
        w4 = w.reshape(4, H, w.shape[-1])[gate_perm]
        return jnp.pad(w4, ((0, 0), (0, Hp - H), (0, 0))).reshape(
            4 * Hp, w.shape[-1])

    w_ih_p = pad_gates(w_ih)                                       # [4Hp, E]
    w_hh_p = jnp.pad(pad_gates(w_hh), ((0, 0), (0, Hp - H)))       # [4Hp, Hp]
    b4 = (b_ih + b_hh).reshape(4, H)[gate_perm]
    b_all = jnp.pad(b4, ((0, 0), (0, Hp - H))).reshape(1, 4 * Hp)
    b_all = b_all.astype(jnp.float32)                              # [1, 4Hp]

    # bf16 matmul operands (f32 accumulation inside the kernels).
    w_ih_t = w_ih_p.T.astype(jnp.bfloat16)                         # [E,  4Hp]
    w_hh_t = w_hh_p.T.astype(jnp.bfloat16)                         # [Hp, 4Hp]

    vmem_cap = _usable_vmem_bytes()

    # ---------------- Kernel 1: LSTM recurrence ----------------------------
    lstm_kernel = functools.partial(
        _lstm_seq_kernel, seq_len=T, hidden_pad=Hp, batch_tile=BT)

    lstm_blk = (T * BT * E * 2            # x block (bf16)
                + E * 4 * Hp * 2          # W_ih^T (bf16)
                + Hp * 4 * Hp * 2         # W_hh^T (bf16)
                + 4 * Hp * 4              # bias (f32)
                + T * BT * Hp * 4)        # h_out block (f32)
    lstm_scratch = T * BT * 4 * Hp * 4    # hoisted x@W_ih scratch (f32)
    lstm_vmem = int(min(max(int(1.3 * (2 * lstm_blk + lstm_scratch)), 4 << 20),
                        vmem_cap))

    h_seq = pl.pallas_call(
        lstm_kernel,
        out_shape=jax.ShapeDtypeStruct((T, Bp, Hp), jnp.float32),
        grid=(grid_b,),
        in_specs=[
            pl.BlockSpec((T, BT, E), lambda b: (0, b, 0)),     # x (time-major)
            pl.BlockSpec((E, 4 * Hp), lambda b: (0, 0)),       # W_ih^T (resident)
            pl.BlockSpec((Hp, 4 * Hp), lambda b: (0, 0)),      # W_hh^T (resident)
            pl.BlockSpec((1, 4 * Hp), lambda b: (0, 0)),       # bias   (resident)
        ],
        out_specs=pl.BlockSpec((T, BT, Hp), lambda b: (0, b, 0)),
        scratch_shapes=[pltpu.VMEM((T * BT, 4 * Hp), jnp.float32)],
        compiler_params=pltpu.CompilerParams(
            dimension_semantics=("parallel",),   # batch tiles -> 2nd TC on v7x
            vmem_limit_bytes=lstm_vmem),
    )(x_tm, w_ih_t, w_hh_t, b_all)                                 # [T, Bp, Hp] f32

    # ---------------- Kernel 2: vocab projection ----------------------------
    # Transpose the (small) h tensor to batch-major so logits come out in
    # [Bp, T, Vp] order directly (no full-size logits transpose afterwards).
    h_bt = jnp.transpose(h_seq, (1, 0, 2)).reshape(Bp * T, Hp)     # [M, Hp]
    M = Bp * T                                                     # multiple of 8
    tm = min(256, M)
    M_pad = _round_up(M, tm)
    if M_pad != M:
        h_bt = jnp.pad(h_bt, ((0, M_pad - M), (0, 0)))
    tv = min(1024, _round_up(V, 128))
    Vp = _round_up(V, tv)

    w_lin_t = jnp.pad(w_lin.T, ((0, Hp - H), (0, Vp - V))).astype(jnp.bfloat16)
    b_lin_p = jnp.pad(b_lin, (0, Vp - V)).reshape(1, Vp).astype(jnp.float32)

    proj_blk = tm * Hp * 4 + Hp * tv * 2 + tv * 4 + tm * tv * 4
    proj_vmem = int(min(max(int(1.3 * 2 * proj_blk), 4 << 20), vmem_cap))

    # Grid order (vocab, rows): rows innermost -> the W_lin^T tile is DMA'd
    # once per vocab tile and stays resident across the row loop.
    logits_flat = pl.pallas_call(
        _proj_kernel,
        out_shape=jax.ShapeDtypeStruct((M_pad, Vp), jnp.float32),
        grid=(Vp // tv, M_pad // tm),
        in_specs=[
            pl.BlockSpec((tm, Hp), lambda j, i: (i, 0)),   # h rows (f32 -> bf16 in kernel)
            pl.BlockSpec((Hp, tv), lambda j, i: (0, j)),   # W_lin^T vocab tile (resident)
            pl.BlockSpec((1, tv), lambda j, i: (0, j)),    # b_lin vocab tile
        ],
        out_specs=pl.BlockSpec((tm, tv), lambda j, i: (i, j)),
        compiler_params=pltpu.CompilerParams(
            dimension_semantics=("parallel", "parallel"),
            vmem_limit_bytes=proj_vmem),
    )(h_bt, w_lin_t, b_lin_p)                                      # [M_pad, Vp]

    out = logits_flat[:M].reshape(Bp, T, Vp)[:B, :, :V]            # [B, T, V]
    return out


def _reference_forward(features, captions, params):
    """Pure-JAX f32 reference mirroring the PyTorch module."""
    embed_tbl = params["embed"]
    w_ih, w_hh = params["w_ih"], params["w_hh"]
    b = params["b_ih"] + params["b_hh"]
    w_lin, b_lin = params["w_lin"], params["b_lin"]
    H = w_hh.shape[1]

    cap_emb = embed_tbl[captions[:, :-1]]
    x = jnp.concatenate([features[:, None, :], cap_emb], axis=1)
    B = x.shape[0]

    def step(carry, x_t):
        h, c = carry
        gates = x_t @ w_ih.T + h @ w_hh.T + b
        i = jax.nn.sigmoid(gates[:, 0 * H:1 * H])
        f = jax.nn.sigmoid(gates[:, 1 * H:2 * H])
        g = jnp.tanh(gates[:, 2 * H:3 * H])
        o = jax.nn.sigmoid(gates[:, 3 * H:4 * H])
        c_new = f * c + i * g
        h_new = o * jnp.tanh(c_new)
        return (h_new, c_new), h_new

    init = (jnp.zeros((B, H), jnp.float32), jnp.zeros((B, H), jnp.float32))
    _, h_seq = jax.lax.scan(step, init, jnp.transpose(x, (1, 0, 2)))
    h_seq = jnp.transpose(h_seq, (1, 0, 2))                        # [B, T, H]
    return h_seq @ w_lin.T + b_lin


if __name__ == "__main__":
    # Small sizes consistent with the module: embed=32, hidden=32, vocab=128.
    B, Tc = 2, 8
    embed_size, hidden_size, vocab_size = 32, 32, 128

    key = jax.random.PRNGKey(0)
    k = jax.random.split(key, 8)

    params = {
        "embed": 0.1 * jax.random.normal(k[0], (vocab_size, embed_size), jnp.float32),
        "w_ih": 0.1 * jax.random.normal(k[1], (4 * hidden_size, embed_size), jnp.float32),
        "w_hh": 0.1 * jax.random.normal(k[2], (4 * hidden_size, hidden_size), jnp.float32),
        "b_ih": 0.1 * jax.random.normal(k[3], (4 * hidden_size,), jnp.float32),
        "b_hh": 0.1 * jax.random.normal(k[4], (4 * hidden_size,), jnp.float32),
        "w_lin": 0.1 * jax.random.normal(k[5], (vocab_size, hidden_size), jnp.float32),
        "b_lin": 0.1 * jax.random.normal(k[6], (vocab_size,), jnp.float32),
    }

    features = jax.random.normal(k[7], (B, embed_size), jnp.float32)
    captions = jax.random.randint(key, (B, Tc), 0, vocab_size, jnp.int32)

    out = decoder_rnn_forward(features, captions, params)
    out = jax.block_until_ready(out)

    ref = _reference_forward(features, captions, params)
    assert out.shape == (B, Tc, vocab_size)
    # bf16 matmul operands (f32 accumulation) vs f32 reference -> relaxed tol.
    assert jnp.allclose(out, ref, atol=1e-2, rtol=1e-2), "mismatch vs reference"

    print("KERNEL_OK")
</pallas_src>

<mosaic_0001>
module attributes {stable_mosaic.version = 11 : i64} {
  func.func @_lstm_seq_kernel(%arg0: i32, %arg1: memref<8x8x32xbf16, #tpu.memory_space<vmem>>, %arg2: memref<32x512xbf16, #tpu.memory_space<vmem>>, %arg3: memref<128x512xbf16, #tpu.memory_space<vmem>>, %arg4: memref<1x512xf32, #tpu.memory_space<vmem>>, %arg5: memref<8x8x128xf32, #tpu.memory_space<vmem>>, %arg6: memref<64x512xf32, #tpu.memory_space<vmem>>) attributes {dimension_semantics = [#tpu.dimension_semantics<parallel>], iteration_bounds = array<i64: 1>, scalar_prefetch = 0 : i64, scratch_operands = 1 : i64, tpu.core_type = #tpu.core_type<tc>, window_params = [{transform_indices = @transform_0, window_bounds = array<i64: 8, 8, 32>}, {pipeline_mode = #tpu.pipeline_mode<synchronous>, transform_indices = @transform_1, window_bounds = array<i64: 32, 512>}, {pipeline_mode = #tpu.pipeline_mode<synchronous>, transform_indices = @transform_2, window_bounds = array<i64: 128, 512>}, {pipeline_mode = #tpu.pipeline_mode<synchronous>, transform_indices = @transform_3, window_bounds = array<i64: 1, 512>}, {transform_indices = @transform_4, window_bounds = array<i64: 8, 8, 128>}]} {
    %c0 = arith.constant 0 : index
    %c0_0 = arith.constant 0 : index
    %c0_1 = arith.constant 0 : index
    %0 = vector.load %arg1[%c0, %c0_0, %c0_1] : memref<8x8x32xbf16, #tpu.memory_space<vmem>>, vector<8x8x32xbf16>
    %1 = vector.shape_cast %0 : vector<8x8x32xbf16> to vector<64x32xbf16>
    %c0_2 = arith.constant 0 : index
    %c0_3 = arith.constant 0 : index
    %2 = vector.load %arg2[%c0_2, %c0_3] : memref<32x512xbf16, #tpu.memory_space<vmem>>, vector<32x512xbf16>
    %cst = arith.constant dense<0.000000e+00> : vector<64x512xf32>
    %3 = tpu.matmul %1, %2, %cst {dimension_numbers = #tpu.dot_dimension_numbers<[1], [0], [0], [1], [0, 0, 1, 1], [], []>} : vector<64x32xbf16>, vector<32x512xbf16>, vector<64x512xf32> -> vector<64x512xf32>
    %c0_4 = arith.constant 0 : index
    %c0_5 = arith.constant 0 : index
    %4 = vector.load %arg4[%c0_4, %c0_5] : memref<1x512xf32, #tpu.memory_space<vmem>>, vector<1x512xf32>
    %5 = vector.broadcast %4 : vector<1x512xf32> to vector<64x512xf32>
    %6 = arith.addf %3, %5 : vector<64x512xf32>
    %c0_6 = arith.constant 0 : index
    %c0_7 = arith.constant 0 : index
    %7 = vector.load %arg6[%c0_6, %c0_7] : memref<64x512xf32, #tpu.memory_space<vmem>>, vector<64x512xf32>
    tpu.vector_store %arg6[%c0_6, %c0_7], %6 {strides = array<i32>} : memref<64x512xf32, #tpu.memory_space<vmem>>, vector<64x512xf32>,
    %c0_8 = arith.constant 0 : index
    %c0_9 = arith.constant 0 : index
    %8 = vector.load %arg3[%c0_8, %c0_9] : memref<128x512xbf16, #tpu.memory_space<vmem>>, vector<128x512xbf16>
    %cst_10 = arith.constant 0.000000e+00 : bf16
    %9 = vector.broadcast %cst_10 : bf16 to vector<8x128xbf16>
    %cst_11 = arith.constant 0.000000e+00 : f32
    %10 = vector.broadcast %cst_11 : f32 to vector<8x128xf32>
    %c0_i32 = arith.constant 0 : i32
    %c8_i32 = arith.constant 8 : i32
    %11 = arith.muli %c0_i32, %c8_i32 : i32
    %12 = tpu.assume_multiple %11, 8 : i32
    %13 = arith.index_cast %12 : i32 to index
    %c0_12 = arith.constant 0 : index
    %14 = vector.load %arg6[%13, %c0_12] : memref<64x512xf32, #tpu.memory_space<vmem>>, vector<8x512xf32>
    %cst_13 = arith.constant dense<0.000000e+00> : vector<8x512xf32>
    %15 = tpu.matmul %9, %8, %cst_13 {dimension_numbers = #tpu.dot_dimension_numbers<[1], [0], [0], [1], [0, 0, 1, 1], [], []>} : vector<8x128xbf16>, vector<128x512xbf16>, vector<8x512xf32> -> vector<8x512xf32>
    %16 = arith.addf %14, %15 : vector<8x512xf32>
    %17 = vector.extract_strided_slice %16 {offsets = [0, 0], sizes = [8, 384], strides = [1, 1]} : vector<8x512xf32> to vector<8x384xf32>
    %18 = arith.negf %17 : vector<8x384xf32>
    %19 = math.exp %18 : vector<8x384xf32>
    %cst_14 = arith.constant 1.000000e+00 : f32
    %20 = vector.broadcast %cst_14 : f32 to vector<8x384xf32>
    %21 = arith.addf %20, %19 : vector<8x384xf32>
    %22 = arith.divf %20, %21 : vector<8x384xf32>
    %23 = vector.extract_strided_slice %22 {offsets = [0, 0], sizes = [8, 128], strides = [1, 1]} : vector<8x384xf32> to vector<8x128xf32>
    %24 = vector.extract_strided_slice %22 {offsets = [0, 128], sizes = [8, 128], strides = [1, 1]} : vector<8x384xf32> to vector<8x128xf32>
    %25 = vector.extract_strided_slice %22 {offsets = [0, 256], sizes = [8, 128], strides = [1, 1]} : vector<8x384xf32> to vector<8x128xf32>
    %26 = vector.extract_strided_slice %16 {offsets = [0, 384], sizes = [8, 128], strides = [1, 1]} : vector<8x512xf32> to vector<8x128xf32>
    %27 = math.tanh %26 : vector<8x128xf32>
    %28 = arith.mulf %24, %10 : vector<8x128xf32>
    %29 = arith.mulf %23, %27 : vector<8x128xf32>
    %30 = arith.addf %28, %29 : vector<8x128xf32>
    %31 = math.tanh %30 : vector<8x128xf32>
    %32 = arith.mulf %25, %31 : vector<8x128xf32>
    %33 = arith.index_cast %c0_i32 : i32 to index
    %c0_15 = arith.constant 0 : index
    %c0_16 = arith.constant 0 : index
    %34 = vector.load %arg5[%33, %c0_15, %c0_16] : memref<8x8x128xf32, #tpu.memory_space<vmem>>, vector<1x8x128xf32>
    %35 = vector.shape_cast %34 : vector<1x8x128xf32> to vector<8x128xf32>
    %36 = vector.shape_cast %32 : vector<8x128xf32> to vector<1x8x128xf32>
    tpu.vector_store %arg5[%33, %c0_15, %c0_16], %36 {strides = array<i32>} : memref<8x8x128xf32, #tpu.memory_space<vmem>>, vector<1x8x128xf32>,
    %37 = arith.truncf %32 : vector<8x128xf32> to vector<8x128xbf16>
    %c1_i32 = arith.constant 1 : i32
    %c8_i32_17 = arith.constant 8 : i32
    %38 = arith.muli %c1_i32, %c8_i32_17 : i32
    %39 = tpu.assume_multiple %38, 8 : i32
    %40 = arith.index_cast %39 : i32 to index
    %c0_18 = arith.constant 0 : index
    %41 = vector.load %arg6[%40, %c0_18] : memref<64x512xf32, #tpu.memory_space<vmem>>, vector<8x512xf32>
    %cst_19 = arith.constant dense<0.000000e+00> : vector<8x512xf32>
    %42 = tpu.matmul %37, %8, %cst_19 {dimension_numbers = #tpu.dot_dimension_numbers<[1], [0], [0], [1], [0, 0, 1, 1], [], []>} : vector<8x128xbf16>, vector<128x512xbf16>, vector<8x512xf32> -> vector<8x512xf32>
    %43 = arith.addf %41, %42 : vector<8x512xf32>
    %44 = vector.extract_strided_slice %43 {offsets = [0, 0], sizes = [8, 384], strides = [1, 1]} : vector<8x512xf32> to vector<8x384xf32>
    %45 = arith.negf %44 : vector<8x384xf32>
    %46 = math.exp %45 : vector<8x384xf32>
    %cst_20 = arith.constant 1.000000e+00 : f32
    %47 = vector.broadcast %cst_20 : f32 to vector<8x384xf32>
    %48 = arith.addf %47, %46 : vector<8x384xf32>
    %49 = arith.divf %47, %48 : vector<8x384xf32>
    %50 = vector.extract_strided_slice %49 {offsets = [0, 0], sizes = [8, 128], strides = [1, 1]} : vector<8x384xf32> to vector<8x128xf32>
    %51 = vector.extract_strided_slice %49 {offsets = [0, 128], sizes = [8, 128], strides = [1, 1]} : vector<8x384xf32> to vector<8x128xf32>
    %52 = vector.extract_strided_slice %49 {offsets = [0, 256], sizes = [8, 128], strides = [1, 1]} : vector<8x384xf32> to vector<8x128xf32>
    %53 = vector.extract_strided_slice %43 {offsets = [0, 384], sizes = [8, 128], strides = [1, 1]} : vector<8x512xf32> to vector<8x128xf32>
    %54 = math.tanh %53 : vector<8x128xf32>
    %55 = arith.mulf %51, %30 : vector<8x128xf32>
    %56 = arith.mulf %50, %54 : vector<8x128xf32>
    %57 = arith.addf %55, %56 : vector<8x128xf32>
    %58 = math.tanh %57 : vector<8x128xf32>
    %59 = arith.mulf %52, %58 : vector<8x128xf32>
    %60 = arith.index_cast %c1_i32 : i32 to index
    %c0_21 = arith.constant 0 : index
    %c0_22 = arith.constant 0 : index
    %61 = vector.load %arg5[%60, %c0_21, %c0_22] : memref<8x8x128xf32, #tpu.memory_space<vmem>>, vector<1x8x128xf32>
    %62 = vector.shape_cast %61 : vector<1x8x128xf32> to vector<8x128xf32>
    %63 = vector.shape_cast %59 : vector<8x128xf32> to vector<1x8x128xf32>
    tpu.vector_store %arg5[%60, %c0_21, %c0_22], %63 {strides = array<i32>} : memref<8x8x128xf32, #tpu.memory_space<vmem>>, vector<1x8x128xf32>,
    %64 = arith.truncf %59 : vector<8x128xf32> to vector<8x128xbf16>
    %c2_i32 = arith.constant 2 : i32
    %c8_i32_23 = arith.constant 8 : i32
    %65 = arith.muli %c2_i32, %c8_i32_23 : i32
    %66 = tpu.assume_multiple %65, 8 : i32
    %67 = arith.index_cast %66 : i32 to index
    %c0_24 = arith.constant 0 : index
    %68 = vector.load %arg6[%67, %c0_24] : memref<64x512xf32, #tpu.memory_space<vmem>>, vector<8x512xf32>
    %cst_25 = arith.constant dense<0.000000e+00> : vector<8x512xf32>
    %69 = tpu.matmul %64, %8, %cst_25 {dimension_numbers = #tpu.dot_dimension_numbers<[1], [0], [0], [1], [0, 0, 1, 1], [], []>} : vector<8x128xbf16>, vector<128x512xbf16>, vector<8x512xf32> -> vector<8x512xf32>
    %70 = arith.addf %68, %69 : vector<8x512xf32>
    %71 = vector.extract_strided_slice %70 {offsets = [0, 0], sizes = [8, 384], strides = [1, 1]} : vector<8x512xf32> to vector<8x384xf32>
    %72 = arith.negf %71 : vector<8x384xf32>
    %73 = math.exp %72 : vector<8x384xf32>
    %cst_26 = arith.constant 1.000000e+00 : f32
    %74 = vector.broadcast %cst_26 : f32 to vector<8x384xf32>
    %75 = arith.addf %74, %73 : vector<8x384xf32>
    %76 = arith.divf %74, %75 : vector<8x384xf32>
    %77 = vector.extract_strided_slice %76 {offsets = [0, 0], sizes = [8, 128], strides = [1, 1]} : vector<8x384xf32> to vector<8x128xf32>
    %78 = vector.extract_strided_slice %76 {offsets = [0, 128], sizes = [8, 128], strides = [1, 1]} : vector<8x384xf32> to vector<8x128xf32>
    %79 = vector.extract_strided_slice %76 {offsets = [0, 256], sizes = [8, 128], strides = [1, 1]} : vector<8x384xf32> to vector<8x128xf32>
    %80 = vector.extract_strided_slice %70 {offsets = [0, 384], sizes = [8, 128], strides = [1, 1]} : vector<8x512xf32> to vector<8x128xf32>
    %81 = math.tanh %80 : vector<8x128xf32>
    %82 = arith.mulf %78, %57 : vector<8x128xf32>
    %83 = arith.mulf %77, %81 : vector<8x128xf32>
    %84 = arith.addf %82, %83 : vector<8x128xf32>
    %85 = math.tanh %84 : vector<8x128xf32>
    %86 = arith.mulf %79, %85 : vector<8x128xf32>
    %87 = arith.index_cast %c2_i32 : i32 to index
    %c0_27 = arith.constant 0 : index
    %c0_28 = arith.constant 0 : index
    %88 = vector.load %arg5[%87, %c0_27, %c0_28] : memref<8x8x128xf32, #tpu.memory_space<vmem>>, vector<1x8x128xf32>
    %89 = vector.shape_cast %88 : vector<1x8x128xf32> to vector<8x128xf32>
    %90 = vector.shape_cast %86 : vector<8x128xf32> to vector<1x8x128xf32>
    tpu.vector_store %arg5[%87, %c0_27, %c0_28], %90 {strides = array<i32>} : memref<8x8x128xf32, #tpu.memory_space<vmem>>, vector<1x8x128xf32>,
    %91 = arith.truncf %86 : vector<8x128xf32> to vector<8x128xbf16>
    %c3_i32 = arith.constant 3 : i32
    %c8_i32_29 = arith.constant 8 : i32
    %92 = arith.muli %c3_i32, %c8_i32_29 : i32
    %93 = tpu.assume_multiple %92, 8 : i32
    %94 = arith.index_cast %93 : i32 to index
    %c0_30 = arith.constant 0 : index
    %95 = vector.load %arg6[%94, %c0_30] : memref<64x512xf32, #tpu.memory_space<vmem>>, vector<8x512xf32>
    %cst_31 = arith.constant dense<0.000000e+00> : vector<8x512xf32>
    %96 = tpu.matmul %91, %8, %cst_31 {dimension_numbers = #tpu.dot_dimension_numbers<[1], [0], [0], [1], [0, 0, 1, 1], [], []>} : vector<8x128xbf16>, vector<128x512xbf16>, vector<8x512xf32> -> vector<8x512xf32>
    %97 = arith.addf %95, %96 : vector<8x512xf32>
    %98 = vector.extract_strided_slice %97 {offsets = [0, 0], sizes = [8, 384], strides = [1, 1]} : vector<8x512xf32> to vector<8x384xf32>
    %99 = arith.negf %98 : vector<8x384xf32>
    %100 = math.exp %99 : vector<8x384xf32>
    %cst_32 = arith.constant 1.000000e+00 : f32
    %101 = vector.broadcast %cst_32 : f32 to vector<8x384xf32>
    %102 = arith.addf %101, %100 : vector<8x384xf32>
    %103 = arith.divf %101, %102 : vector<8x384xf32>
    %104 = vector.extract_strided_slice %103 {offsets = [0, 0], sizes = [8, 128], strides = [1, 1]} : vector<8x384xf32> to vector<8x128xf32>
    %105 = vector.extract_strided_slice %103 {offsets = [0, 128], sizes = [8, 128], strides = [1, 1]} : vector<8x384xf32> to vector<8x128xf32>
    %106 = vector.extract_strided_slice %103 {offsets = [0, 256], sizes = [8, 128], strides = [1, 1]} : vector<8x384xf32> to vector<8x128xf32>
    %107 = vector.extract_strided_slice %97 {offsets = [0, 384], sizes = [8, 128], strides = [1, 1]} : vector<8x512xf32> to vector<8x128xf32>
    %108 = math.tanh %107 : vector<8x128xf32>
    %109 = arith.mulf %105, %84 : vector<8x128xf32>
    %110 = arith.mulf %104, %108 : vector<8x128xf32>
    %111 = arith.addf %109, %110 : vector<8x128xf32>
    %112 = math.tanh %111 : vector<8x128xf32>
    %113 = arith.mulf %106, %112 : vector<8x128xf32>
    %114 = arith.index_cast %c3_i32 : i32 to index
    %c0_33 = arith.constant 0 : index
    %c0_34 = arith.constant 0 : index
    %115 = vector.load %arg5[%114, %c0_33, %c0_34] : memref<8x8x128xf32, #tpu.memory_space<vmem>>, vector<1x8x128xf32>
    %116 = vector.shape_cast %115 : vector<1x8x128xf32> to vector<8x128xf32>
    %117 = vector.shape_cast %113 : vector<8x128xf32> to vector<1x8x128xf32>
    tpu.vector_store %arg5[%114, %c0_33, %c0_34], %117 {strides = array<i32>} : memref<8x8x128xf32, #tpu.memory_space<vmem>>, vector<1x8x128xf32>,
    %118 = arith.truncf %113 : vector<8x128xf32> to vector<8x128xbf16>
    %c4_i32 = arith.constant 4 : i32
    %c8_i32_35 = arith.constant 8 : i32
    %119 = arith.muli %c4_i32, %c8_i32_35 : i32
    %120 = tpu.assume_multiple %119, 8 : i32
    %121 = arith.index_cast %120 : i32 to index
    %c0_36 = arith.constant 0 : index
    %122 = vector.load %arg6[%121, %c0_36] : memref<64x512xf32, #tpu.memory_space<vmem>>, vector<8x512xf32>
    %cst_37 = arith.constant dense<0.000000e+00> : vector<8x512xf32>
    %123 = tpu.matmul %118, %8, %cst_37 {dimension_numbers = #tpu.dot_dimension_numbers<[1], [0], [0], [1], [0, 0, 1, 1], [], []>} : vector<8x128xbf16>, vector<128x512xbf16>, vector<8x512xf32> -> vector<8x512xf32>
    %124 = arith.addf %122, %123 : vector<8x512xf32>
    %125 = vector.extract_strided_slice %124 {offsets = [0, 0], sizes = [8, 384], strides = [1, 1]} : vector<8x512xf32> to vector<8x384xf32>
    %126 = arith.negf %125 : vector<8x384xf32>
    %127 = math.exp %126 : vector<8x384xf32>
    %cst_38 = arith.constant 1.000000e+00 : f32
    %128 = vector.broadcast %cst_38 : f32 to vector<8x384xf32>
    %129 = arith.addf %128, %127 : vector<8x384xf32>
    %130 = arith.divf %128, %129 : vector<8x384xf32>
    %131 = vector.extract_strided_slice %130 {offsets = [0, 0], sizes = [8, 128], strides = [1, 1]} : vector<8x384xf32> to vector<8x128xf32>
    %132 = vector.extract_strided_slice %130 {offsets = [0, 128], sizes = [8, 128], strides = [1, 1]} : vector<8x384xf32> to vector<8x128xf32>
    %133 = vector.extract_strided_slice %130 {offsets = [0, 256], sizes = [8, 128], strides = [1, 1]} : vector<8x384xf32> to vector<8x128xf32>
    %134 = vector.extract_strided_slice %124 {offsets = [0, 384], sizes = [8, 128], strides = [1, 1]} : vector<8x512xf32> to vector<8x128xf32>
    %135 = math.tanh %134 : vector<8x128xf32>
    %136 = arith.mulf %132, %111 : vector<8x128xf32>
    %137 = arith.mulf %131, %135 : vector<8x128xf32>
    %138 = arith.addf %136, %137 : vector<8x128xf32>
    %139 = math.tanh %138 : vector<8x128xf32>
    %140 = arith.mulf %133, %139 : vector<8x128xf32>
    %141 = arith.index_cast %c4_i32 : i32 to index
    %c0_39 = arith.constant 0 : index
    %c0_40 = arith.constant 0 : index
    %142 = vector.load %arg5[%141, %c0_39, %c0_40] : memref<8x8x128xf32, #tpu.memory_space<vmem>>, vector<1x8x128xf32>
    %143 = vector.shape_cast %142 : vector<1x8x128xf32> to vector<8x128xf32>
    %144 = vector.shape_cast %140 : vector<8x128xf32> to vector<1x8x128xf32>
    tpu.vector_store %arg5[%141, %c0_39, %c0_40], %144 {strides = array<i32>} : memref<8x8x128xf32, #tpu.memory_space<vmem>>, vector<1x8x128xf32>,
    %145 = arith.truncf %140 : vector<8x128xf32> to vector<8x128xbf16>
    %c5_i32 = arith.constant 5 : i32
    %c8_i32_41 = arith.constant 8 : i32
    %146 = arith.muli %c5_i32, %c8_i32_41 : i32
    %147 = tpu.assume_multiple %146, 8 : i32
    %148 = arith.index_cast %147 : i32 to index
    %c0_42 = arith.constant 0 : index
    %149 = vector.load %arg6[%148, %c0_42] : memref<64x512xf32, #tpu.memory_space<vmem>>, vector<8x512xf32>
    %cst_43 = arith.constant dense<0.000000e+00> : vector<8x512xf32>
    %150 = tpu.matmul %145, %8, %cst_43 {dimension_numbers = #tpu.dot_dimension_numbers<[1], [0], [0], [1], [0, 0, 1, 1], [], []>} : vector<8x128xbf16>, vector<128x512xbf16>, vector<8x512xf32> -> vector<8x512xf32>
    %151 = arith.addf %149, %150 : vector<8x512xf32>
    %152 = vector.extract_strided_slice %151 {offsets = [0, 0], sizes = [8, 384], strides = [1, 1]} : vector<8x512xf32> to vector<8x384xf32>
    %153 = arith.negf %152 : vector<8x384xf32>
    %154 = math.exp %153 : vector<8x384xf32>
    %cst_44 = arith.constant 1.000000e+00 : f32
    %155 = vector.broadcast %cst_44 : f32 to vector<8x384xf32>
    %156 = arith.addf %155, %154 : vector<8x384xf32>
    %157 = arith.divf %155, %156 : vector<8x384xf32>
    %158 = vector.extract_strided_slice %157 {offsets = [0, 0], sizes = [8, 128], strides = [1, 1]} : vector<8x384xf32> to vector<8x128xf32>
    %159 = vector.extract_strided_slice %157 {offsets = [0, 128], sizes = [8, 128], strides = [1, 1]} : vector<8x384xf32> to vector<8x128xf32>
    %160 = vector.extract_strided_slice %157 {offsets = [0, 256], sizes = [8, 128], strides = [1, 1]} : vector<8x384xf32> to vector<8x128xf32>
    %161 = vector.extract_strided_slice %151 {offsets = [0, 384], sizes = [8, 128], strides = [1, 1]} : vector<8x512xf32> to vector<8x128xf32>
    %162 = math.tanh %161 : vector<8x128xf32>
    %163 = arith.mulf %159, %138 : vector<8x128xf32>
    %164 = arith.mulf %158, %162 : vector<8x128xf32>
    %165 = arith.addf %163, %164 : vector<8x128xf32>
    %166 = math.tanh %165 : vector<8x128xf32>
    %167 = arith.mulf %160, %166 : vector<8x128xf32>
    %168 = arith.index_cast %c5_i32 : i32 to index
    %c0_45 = arith.constant 0 : index
    %c0_46 = arith.constant 0 : index
    %169 = vector.load %arg5[%168, %c0_45, %c0_46] : memref<8x8x128xf32, #tpu.memory_space<vmem>>, vector<1x8x128xf32>
    %170 = vector.shape_cast %169 : vector<1x8x128xf32> to vector<8x128xf32>
    %171 = vector.shape_cast %167 : vector<8x128xf32> to vector<1x8x128xf32>
    tpu.vector_store %arg5[%168, %c0_45, %c0_46], %171 {strides = array<i32>} : memref<8x8x128xf32, #tpu.memory_space<vmem>>, vector<1x8x128xf32>,
    %172 = arith.truncf %167 : vector<8x128xf32> to vector<8x128xbf16>
    %c6_i32 = arith.constant 6 : i32
    %c8_i32_47 = arith.constant 8 : i32
    %173 = arith.muli %c6_i32, %c8_i32_47 : i32
    %174 = tpu.assume_multiple %173, 8 : i32
    %175 = arith.index_cast %174 : i32 to index
    %c0_48 = arith.constant 0 : index
    %176 = vector.load %arg6[%175, %c0_48] : memref<64x512xf32, #tpu.memory_space<vmem>>, vector<8x512xf32>
    %cst_49 = arith.constant dense<0.000000e+00> : vector<8x512xf32>
    %177 = tpu.matmul %172, %8, %cst_49 {dimension_numbers = #tpu.dot_dimension_numbers<[1], [0], [0], [1], [0, 0, 1, 1], [], []>} : vector<8x128xbf16>, vector<128x512xbf16>, vector<8x512xf32> -> vector<8x512xf32>
    %178 = arith.addf %176, %177 : vector<8x512xf32>
    %179 = vector.extract_strided_slice %178 {offsets = [0, 0], sizes = [8, 384], strides = [1, 1]} : vector<8x512xf32> to vector<8x384xf32>
    %180 = arith.negf %179 : vector<8x384xf32>
    %181 = math.exp %180 : vector<8x384xf32>
    %cst_50 = arith.constant 1.000000e+00 : f32
    %182 = vector.broadcast %cst_50 : f32 to vector<8x384xf32>
    %183 = arith.addf %182, %181 : vector<8x384xf32>
    %184 = arith.divf %182, %183 : vector<8x384xf32>
    %185 = vector.extract_strided_slice %184 {offsets = [0, 0], sizes = [8, 128], strides = [1, 1]} : vector<8x384xf32> to vector<8x128xf32>
    %186 = vector.extract_strided_slice %184 {offsets = [0, 128], sizes = [8, 128], strides = [1, 1]} : vector<8x384xf32> to vector<8x128xf32>
    %187 = vector.extract_strided_slice %184 {offsets = [0, 256], sizes = [8, 128], strides = [1, 1]} : vector<8x384xf32> to vector<8x128xf32>
    %188 = vector.extract_strided_slice %178 {offsets = [0, 384], sizes = [8, 128], strides = [1, 1]} : vector<8x512xf32> to vector<8x128xf32>
    %189 = math.tanh %188 : vector<8x128xf32>
    %190 = arith.mulf %186, %165 : vector<8x128xf32>
    %191 = arith.mulf %185, %189 : vector<8x128xf32>
    %192 = arith.addf %190, %191 : vector<8x128xf32>
    %193 = math.tanh %192 : vector<8x128xf32>
    %194 = arith.mulf %187, %193 : vector<8x128xf32>
    %195 = arith.index_cast %c6_i32 : i32 to index
    %c0_51 = arith.constant 0 : index
    %c0_52 = arith.constant 0 : index
    %196 = vector.load %arg5[%195, %c0_51, %c0_52] : memref<8x8x128xf32, #tpu.memory_space<vmem>>, vector<1x8x128xf32>
    %197 = vector.shape_cast %196 : vector<1x8x128xf32> to vector<8x128xf32>
    %198 = vector.shape_cast %194 : vector<8x128xf32> to vector<1x8x128xf32>
    tpu.vector_store %arg5[%195, %c0_51, %c0_52], %198 {strides = array<i32>} : memref<8x8x128xf32, #tpu.memory_space<vmem>>, vector<1x8x128xf32>,
    %199 = arith.truncf %194 : vector<8x128xf32> to vector<8x128xbf16>
    %c7_i32 = arith.constant 7 : i32
    %c8_i32_53 = arith.constant 8 : i32
    %200 = arith.muli %c7_i32, %c8_i32_53 : i32
    %201 = tpu.assume_multiple %200, 8 : i32
    %202 = arith.index_cast %201 : i32 to index
    %c0_54 = arith.constant 0 : index
    %203 = vector.load %arg6[%202, %c0_54] : memref<64x512xf32, #tpu.memory_space<vmem>>, vector<8x512xf32>
    %cst_55 = arith.constant dense<0.000000e+00> : vector<8x512xf32>
    %204 = tpu.matmul %199, %8, %cst_55 {dimension_numbers = #tpu.dot_dimension_numbers<[1], [0], [0], [1], [0, 0, 1, 1], [], []>} : vector<8x128xbf16>, vector<128x512xbf16>, vector<8x512xf32> -> vector<8x512xf32>
    %205 = arith.addf %203, %204 : vector<8x512xf32>
    %206 = vector.extract_strided_slice %205 {offsets = [0, 0], sizes = [8, 384], strides = [1, 1]} : vector<8x512xf32> to vector<8x384xf32>
    %207 = arith.negf %206 : vector<8x384xf32>
    %208 = math.exp %207 : vector<8x384xf32>
    %cst_56 = arith.constant 1.000000e+00 : f32
    %209 = vector.broadcast %cst_56 : f32 to vector<8x384xf32>
    %210 = arith.addf %209, %208 : vector<8x384xf32>
    %211 = arith.divf %209, %210 : vector<8x384xf32>
    %212 = vector.extract_strided_slice %211 {offsets = [0, 0], sizes = [8, 128], strides = [1, 1]} : vector<8x384xf32> to vector<8x128xf32>
    %213 = vector.extract_strided_slice %211 {offsets = [0, 128], sizes = [8, 128], strides = [1, 1]} : vector<8x384xf32> to vector<8x128xf32>
    %214 = vector.extract_strided_slice %211 {offsets = [0, 256], sizes = [8, 128], strides = [1, 1]} : vector<8x384xf32> to vector<8x128xf32>
    %215 = vector.extract_strided_slice %205 {offsets = [0, 384], sizes = [8, 128], strides = [1, 1]} : vector<8x512xf32> to vector<8x128xf32>
    %216 = math.tanh %215 : vector<8x128xf32>
    %217 = arith.mulf %213, %192 : vector<8x128xf32>
    %218 = arith.mulf %212, %216 : vector<8x128xf32>
    %219 = arith.addf %217, %218 : vector<8x128xf32>
    %220 = math.tanh %219 : vector<8x128xf32>
    %221 = arith.mulf %214, %220 : vector<8x128xf32>
    %222 = arith.index_cast %c7_i32 : i32 to index
    %c0_57 = arith.constant 0 : index
    %c0_58 = arith.constant 0 : index
    %223 = vector.load %arg5[%222, %c0_57, %c0_58] : memref<8x8x128xf32, #tpu.memory_space<vmem>>, vector<1x8x128xf32>
    %224 = vector.shape_cast %223 : vector<1x8x128xf32> to vector<8x128xf32>
    %225 = vector.shape_cast %221 : vector<8x128xf32> to vector<1x8x128xf32>
    tpu.vector_store %arg5[%222, %c0_57, %c0_58], %225 {strides = array<i32>} : memref<8x8x128xf32, #tpu.memory_space<vmem>>, vector<1x8x128xf32>,
    %226 = arith.truncf %221 : vector<8x128xf32> to vector<8x128xbf16>
    %c8_i32_59 = arith.constant 8 : i32
    return
  }
  func.func @transform_0(%arg0: i32) -> (i32, i32, i32) {
    %c0_i32 = arith.constant 0 : i32
    %c0_i32_0 = arith.constant 0 : i32
    %c0_i32_1 = arith.constant 0 : i32
    return %c0_i32, %arg0, %c0_i32_0 : i32, i32, i32
  }
  func.func @transform_1(%arg0: i32) -> (i32, i32) {
    %c0_i32 = arith.constant 0 : i32
    %c0_i32_0 = arith.constant 0 : i32
    %c0_i32_1 = arith.constant 0 : i32
    return %c0_i32, %c0_i32_0 : i32, i32
  }
  func.func @transform_2(%arg0: i32) -> (i32, i32) {
    %c0_i32 = arith.constant 0 : i32
    %c0_i32_0 = arith.constant 0 : i32
    %c0_i32_1 = arith.constant 0 : i32
    return %c0_i32, %c0_i32_0 : i32, i32
  }
  func.func @transform_3(%arg0: i32) -> (i32, i32) {
    %c0_i32 = arith.constant 0 : i32
    %c0_i32_0 = arith.constant 0 : i32
    %c0_i32_1 = arith.constant 0 : i32
    return %c0_i32, %c0_i32_0 : i32, i32
  }
  func.func @transform_4(%arg0: i32) -> (i32, i32, i32) {
    %c0_i32 = arith.constant 0 : i32
    %c0_i32_0 = arith.constant 0 : i32
    %c0_i32_1 = arith.constant 0 : i32
    return %c0_i32, %arg0, %c0_i32_0 : i32, i32, i32
  }
}

</mosaic_0001>

<llo_original>
// kernel: tpu_custom_call.1
$region0: #{tpu_custom_call.1}
  #allocation0 [shape = 'u32[]', space=smem, size = 0x4, offset = 0x4, fixed_abs, tag = 'smem constant byte address 0x4 - core index']
  #allocation1 [shape = 'u32[144,128]{1,0:T(1,128)}', space=vmem, size = 0x12000, scoped, tag = 'internal scratch']
  #allocation2 [shape = 'f32[64,512]{1,0:T(8,128)}', space=vmem, size = 0x20000, scoped, tag = 'scratch operand']
  %s0 = inlined_call_operand.hbm [shape: bf16[8,8,32], index: 0, kind: input, shape index: {}]
  %s1 = inlined_call_operand.hbm [shape: bf16[32,512], index: 1, kind: input, shape index: {}]
  %s2 = inlined_call_operand.hbm [shape: bf16[128,512], index: 2, kind: input, shape index: {}]
  %s3 = inlined_call_operand.vmem [shape: f32[1,512], index: 3, kind: input, shape index: {}]
  %s4 = inlined_call_operand.hbm [shape: f32[8,8,128], index: 4, kind: output, shape index: {}]
  %s5 = sld [smem:[#allocation0]]
  $region38: #{tpu_custom_call.1} parent=0
    _
  %s7 = ssub.s32 1, %s5
  %s8 = scalar_select 0, %s7, %s5
  $region1: #{tpu_custom_call.1} parent=0
    #allocation3 [shape = 'u8[16384]{0}', space=vmem, size = 0x4000, scoped, tag = 'input window, operand 0, single buffered']
    #allocation4 [shape = 's32[1]{0}', space=sflag, size = 0x4, scoped, tag = 'scoped memory for tpu_custom_call.1']
    #allocation5 [shape = 's32[1]{0}', space=sflag, size = 0x4, scoped, tag = 'scoped memory for tpu_custom_call.1']
    #allocation6 [shape = 'u8[32768]{0}', space=vmem, size = 0x8000, scoped, tag = 'input window, operand 1, single buffered']
    #allocation7 [shape = 's32[1]{0}', space=sflag, size = 0x4, scoped, tag = 'scoped memory for tpu_custom_call.1']
    #allocation8 [shape = 'u8[131072]{0}', space=vmem, size = 0x20000, scoped, tag = 'input window, operand 2, single buffered']
    #allocation9 [shape = 'u8[32768]{0}', space=vmem, size = 0x8000, scoped, tag = 'output window, operand 0, single buffered']
    %9 = vsyncpa [#allocation4], 0
    %10 = vsyncpa [#allocation7], 0
    %11 = vsyncpa [#allocation5], 0
    // Predicated region
    $region2: #{tpu_custom_call.1} parent=1 // pred_check
      _
    $region3: #{tpu_custom_call.1} parent=1 // pred_check_branch
      %13 = sbr.rel (0) target = $region5
    $region4: #{tpu_custom_call.1} parent=1 // pred_region
      %s15 = ssub.s32 512, 512
      %16 = vsyncadd [#allocation4], %s15
      %s17 = sshll.u32 [#allocation3], 4
      %s18 = int_to_ptr.vmem [resolvable:$true] %s17
      %23 = dma.hbm_to_vmem [thread:$0]  %s0, 512, %s18, [#allocation4], 64, 64, 4
    $region5: #{tpu_custom_call.1} parent=1 // pred_fallthru
      _
    // Predicated region
    $region6: #{tpu_custom_call.1} parent=1 // pred_check
      _
    $region7: #{tpu_custom_call.1} parent=1 // pred_check_branch
      %25 = sbr.rel (0) target = $region9
    $region8: #{tpu_custom_call.1} parent=1 // pred_region
      %s27 = ssub.s32 1024, 1024
      %28 = vsyncadd [#allocation7], %s27
      %s29 = sshll.u32 [#allocation6], 4
      %s30 = int_to_ptr.vmem [resolvable:$true] %s29
      %35 = dma.hbm_to_vmem [thread:$0]  %s1, 1024, %s30, [#allocation7], 256, 256, 16
    $region9: #{tpu_custom_call.1} parent=1 // pred_fallthru
      _
    // Predicated region
    $region10: #{tpu_custom_call.1} parent=1 // pred_check
      _
    $region11: #{tpu_custom_call.1} parent=1 // pred_check_branch
      %37 = sbr.rel (0) target = $region13
    $region12: #{tpu_custom_call.1} parent=1 // pred_region
      %s39 = ssub.s32 4096, 4096
      %40 = vsyncadd [#allocation7], %s39
      %s41 = sshll.u32 [#allocation8], 4
      %s42 = int_to_ptr.vmem [resolvable:$true] %s41
      %47 = dma.hbm_to_vmem [thread:$0]  %s2, 4096, %s42, [#allocation7], 256, 256, 16
    $region13: #{tpu_custom_call.1} parent=1 // pred_fallthru
      _
    // Predicated region
    $region14: #{tpu_custom_call.1} parent=1 // pred_check
      _
    $region15: #{tpu_custom_call.1} parent=1 // pred_check_branch
      %49 = sbr.rel (0) target = $region17
    $region16: #{tpu_custom_call.1} parent=1 // pred_region
      _
    $region17: #{tpu_custom_call.1} parent=1 // pred_fallthru
      _
    // Predicated region
    $region18: #{tpu_custom_call.1} parent=1 // pred_check
      _
    $region19: #{tpu_custom_call.1} parent=1 // pred_check_branch
      %51 = sbr.rel (0) target = $region21
    $region20: #{tpu_custom_call.1} parent=1 // pred_region
      %52 = dma.done [#allocation4], 512
    $region21: #{tpu_custom_call.1} parent=1 // pred_fallthru
      _
    // Predicated region
    $region22: #{tpu_custom_call.1} parent=1 // pred_check
      _
    $region23: #{tpu_custom_call.1} parent=1 // pred_check_branch
      %54 = sbr.rel (0) target = $region25
    $region24: #{tpu_custom_call.1} parent=1 // pred_region
      %55 = dma.done [#allocation7], 1024
    $region25: #{tpu_custom_call.1} parent=1 // pred_fallthru
      _
    // Predicated region
    $region26: #{tpu_custom_call.1} parent=1 // pred_check
      _
    $region27: #{tpu_custom_call.1} parent=1 // pred_check_branch
      %57 = sbr.rel (0) target = $region29
    $region28: #{tpu_custom_call.1} parent=1 // pred_region
      %58 = dma.done [#allocation7], 4096
    $region29: #{tpu_custom_call.1} parent=1 // pred_fallthru
      _
    %v60 = vld [vmem:[#allocation3] sm:$0xf]
    %v61 = vld [vmem:[#allocation3 + $0x4] sm:$0xf]
    %v62 = vld [vmem:[#allocation3 + $0x8] sm:$0xf]
    %v63 = vld [vmem:[#allocation3 + $0xc] sm:$0xf]
    %v64 = vld [vmem:[#allocation3 + $0x10] sm:$0xf]
    %v65 = vld [vmem:[#allocation3 + $0x14] sm:$0xf]
    %v66 = vld [vmem:[#allocation3 + $0x18] sm:$0xf]
    %v67 = vld [vmem:[#allocation3 + $0x1c] sm:$0xf]
    %v68 = vld [vmem:[#allocation6] sm:$0xff]
    %v69 = vld [vmem:[#allocation6 + $0x8] sm:$0xff]
    %v70 = vld [vmem:[#allocation6 + $0x10] sm:$0xff]
    %v71 = vld [vmem:[#allocation6 + $0x18] sm:$0xff]
    %v72 = vld [vmem:[#allocation6 + $0x20] sm:$0xff]
    %v73 = vld [vmem:[#allocation6 + $0x28] sm:$0xff]
    %v74 = vld [vmem:[#allocation6 + $0x30] sm:$0xff]
    %v75 = vld [vmem:[#allocation6 + $0x38] sm:$0xff]
    %v76 = vld [vmem:[%s3] sm:$0xf]
    %v78 = vlaneseq
    %v79 = vshrl.u32 %v78, 7
    %v80 = vsub.s32 0, %v79
    %v81 = vrot.slane %v76, %v80
    %v82 = vlaneseq
    %v83 = vshrl.u32 %v82, 7
    %v84 = vsub.s32 1, %v83
    %v85 = vrot.slane %v76, %v84
    %v86 = vlaneseq
    %v87 = vshrl.u32 %v86, 7
    %v88 = vsub.s32 2, %v87
    %v89 = vrot.slane %v76, %v88
    %v90 = vlaneseq
    %v91 = vshrl.u32 %v90, 7
    %v92 = vsub.s32 3, %v91
    %v93 = vrot.slane %v76, %v92
    %v106 = vunpack.c.l.b16 %v60
    %v107 = vunpack.c.l.b16 %v61
    %v108 = vunpack.c.l.b16 %v62
    %v109 = vunpack.c.l.b16 %v63
    %v110 = vunpack.c.l.b16 %v64
    %v111 = vunpack.c.l.b16 %v65
    %v112 = vunpack.c.l.b16 %v66
    %v113 = vunpack.c.l.b16 %v67
    %v114 = vpack.c.b16 %v107, %v106
    %v115 = vpack.c.b16 %v109, %v108
    %v116 = vpack.c.b16 %v111, %v110
    %v117 = vpack.c.b16 %v113, %v112
    %v126 = vunpack.c.l.b16 %v68
    %v127 = vunpack.c.h.b16 %v68
    %v128 = vunpack.c.l.b16 %v69
    %v129 = vunpack.c.h.b16 %v69
    %v130 = vunpack.c.l.b16 %v70
    %v131 = vunpack.c.h.b16 %v70
    %v132 = vunpack.c.l.b16 %v71
    %v133 = vunpack.c.h.b16 %v71
    %v134 = vunpack.c.l.b16 %v72
    %v135 = vunpack.c.h.b16 %v72
    %v136 = vunpack.c.l.b16 %v73
    %v137 = vunpack.c.h.b16 %v73
    %v138 = vunpack.c.l.b16 %v74
    %v139 = vunpack.c.h.b16 %v74
    %v140 = vunpack.c.l.b16 %v75
    %v141 = vunpack.c.h.b16 %v75
    %v142 = vpack.c.b16 %v130, %v126
    %v143 = vpack.c.b16 %v131, %v127
    %v144 = vpack.c.b16 %v132, %v128
    %v145 = vpack.c.b16 %v133, %v129
    %v146 = vpack.c.b16 %v138, %v134
    %v147 = vpack.c.b16 %v139, %v135
    %v148 = vpack.c.b16 %v140, %v136
    %v149 = vpack.c.b16 %v141, %v137
    %vm158 = vcmask 261120
    %v160 = vsel %vm158, %v114, 0
    %v163 = vsel %vm158, %v115, 0
    %v166 = vsel %vm158, %v116, 0
    %v169 = vsel %vm158, %v117, 0
    %171 = vmatprep.subr.bf16.mxu0 0
    %172 = vmatpush1.bf16.msra.mxu0 0
    %173 = vmatprep.subr.bf16.mxu0 0
    %174 = vmatpush1.bf16.msra.mxu0 0
    %175 = vmatprep.subr.bf16.mxu0 0
    %176 = vmatpush1.bf16.msra.mxu0 0
    %177 = vmatprep.subr.bf16.mxu0 0
    %178 = vmatpush1.bf16.msra.mxu0 0
    %179 = vmatprep.subr.bf16.mxu0 0
    %180 = vmatpush1.bf16.msra.mxu0 0
    %181 = vmatprep.subr.bf16.mxu0 0
    %182 = vmatpush1.bf16.msra.mxu0 0
    %183 = vmatprep.subr.bf16.mxu0 %v147
    %184 = vmatpush1.bf16.msra.mxu0 %v146
    %185 = vmatprep.subr.bf16.mxu0 %v143
    %186 = vmatpush1.bf16.msra.mxu0 %v142
    %187 = vmatprep.subr.bf16.mxu0 0
    %188 = vmatpush2.bf16.msra.mxu0 0
    %189 = vmatprep.subr.bf16.mxu0 0
    %190 = vmatpush2.bf16.msra.mxu0 0
    %191 = vmatprep.subr.bf16.mxu0 0
    %192 = vmatpush2.bf16.msra.mxu0 0
    %193 = vmatprep.subr.bf16.mxu0 0
    %194 = vmatpush2.bf16.msra.mxu0 0
    %195 = vmatprep.subr.bf16.mxu0 0
    %196 = vmatpush2.bf16.msra.mxu0 0
    %197 = vmatprep.subr.bf16.mxu0 0
    %198 = vmatpush2.bf16.msra.mxu0 0
    %199 = vmatprep.subr.bf16.mxu0 0
    %200 = vmatpush2.bf16.msra.mxu0 0
    %201 = vmatprep.subr.bf16.mxu0 0
    %202 = vmatpush2.bf16.msra.mxu0 0
    %203 = vmatprep.mubr.bf16.mxu0 0
    %204 = vmatmul.mubr.bf16.gmra.mxu0 %v160
    %v205 = vpop.f32.mrf.mxu0
    %v206 = vadd.f32 %v81, %v205
    %v207 = vpop.f32.mrf.mxu0
    %v208 = vadd.f32 %v85, %v207
    %v209 = vpop.f32.mrf.mxu0
    %v210 = vadd.f32 %v81, %v209
    %v211 = vpop.f32.mrf.mxu0
    %v212 = vadd.f32 %v85, %v211
    %213 = vmatprep.mubr.bf16.mxu0 0
    %214 = vmatmul.mubr.bf16.gmra.mxu0 %v163
    %v215 = vpop.f32.mrf.mxu0
    %v216 = vadd.f32 %v81, %v215
    %v217 = vpop.f32.mrf.mxu0
    %v218 = vadd.f32 %v85, %v217
    %v219 = vpop.f32.mrf.mxu0
    %v220 = vadd.f32 %v81, %v219
    %v221 = vpop.f32.mrf.mxu0
    %v222 = vadd.f32 %v85, %v221
    %223 = vmatprep.mubr.bf16.mxu0 0
    %224 = vmatmul.mubr.bf16.gmra.mxu0 %v166
    %v225 = vpop.f32.mrf.mxu0
    %v226 = vadd.f32 %v81, %v225
    %v227 = vpop.f32.mrf.mxu0
    %v228 = vadd.f32 %v85, %v227
    %v229 = vpop.f32.mrf.mxu0
    %v230 = vadd.f32 %v81, %v229
    %v231 = vpop.f32.mrf.mxu0
    %v232 = vadd.f32 %v85, %v231
    %233 = vmatprep.mubr.bf16.mxu0 0
    %234 = vmatmul.mubr.bf16.gmra.mxu0 %v169
    %v235 = vpop.f32.mrf.mxu0
    %v236 = vadd.f32 %v81, %v235
    %v237 = vpop.f32.mrf.mxu0
    %v238 = vadd.f32 %v85, %v237
    %v239 = vpop.f32.mrf.mxu0
    %v240 = vadd.f32 %v81, %v239
    %v241 = vpop.f32.mrf.mxu0
    %v242 = vadd.f32 %v85, %v241
    %243 = vdwg.mxu0
    %244 = vmatprep.subr.bf16.mxu0 0
    %245 = vmatpush1.bf16.msra.mxu0 0
    %246 = vmatprep.subr.bf16.mxu0 0
    %247 = vmatpush1.bf16.msra.mxu0 0
    %248 = vmatprep.subr.bf16.mxu0 0
    %249 = vmatpush1.bf16.msra.mxu0 0
    %250 = vmatprep.subr.bf16.mxu0 0
    %251 = vmatpush1.bf16.msra.mxu0 0
    %252 = vmatprep.subr.bf16.mxu0 0
    %253 = vmatpush1.bf16.msra.mxu0 0
    %254 = vmatprep.subr.bf16.mxu0 0
    %255 = vmatpush1.bf16.msra.mxu0 0
    %256 = vmatprep.subr.bf16.mxu0 %v149
    %257 = vmatpush1.bf16.msra.mxu0 %v148
    %258 = vmatprep.subr.bf16.mxu0 %v145
    %259 = vmatpush1.bf16.msra.mxu0 %v144
    %260 = vmatprep.subr.bf16.mxu0 0
    %261 = vmatpush2.bf16.msra.mxu0 0
    %262 = vmatprep.subr.bf16.mxu0 0
    %263 = vmatpush2.bf16.msra.mxu0 0
    %264 = vmatprep.subr.bf16.mxu0 0
    %265 = vmatpush2.bf16.msra.mxu0 0
    %266 = vmatprep.subr.bf16.mxu0 0
    %267 = vmatpush2.bf16.msra.mxu0 0
    %268 = vmatprep.subr.bf16.mxu0 0
    %269 = vmatpush2.bf16.msra.mxu0 0
    %270 = vmatprep.subr.bf16.mxu0 0
    %271 = vmatpush2.bf16.msra.mxu0 0
    %272 = vmatprep.subr.bf16.mxu0 0
    %273 = vmatpush2.bf16.msra.mxu0 0
    %274 = vmatprep.subr.bf16.mxu0 0
    %275 = vmatpush2.bf16.msra.mxu0 0
    %276 = vmatprep.mubr.bf16.mxu0 0
    %277 = vmatmul.mubr.bf16.gmra.mxu0 %v160
    %v278 = vpop.f32.mrf.mxu0
    %v279 = vadd.f32 %v89, %v278
    %v280 = vpop.f32.mrf.mxu0
    %v281 = vadd.f32 %v93, %v280
    %v282 = vpop.f32.mrf.mxu0
    %v283 = vadd.f32 %v89, %v282
    %v284 = vpop.f32.mrf.mxu0
    %v285 = vadd.f32 %v93, %v284
    %286 = vmatprep.mubr.bf16.mxu0 0
    %287 = vmatmul.mubr.bf16.gmra.mxu0 %v163
    %v288 = vpop.f32.mrf.mxu0
    %v289 = vadd.f32 %v89, %v288
    %v290 = vpop.f32.mrf.mxu0
    %v291 = vadd.f32 %v93, %v290
    %v292 = vpop.f32.mrf.mxu0
    %v293 = vadd.f32 %v89, %v292
    %v294 = vpop.f32.mrf.mxu0
    %v295 = vadd.f32 %v93, %v294
    %296 = vmatprep.mubr.bf16.mxu0 0
    %297 = vmatmul.mubr.bf16.gmra.mxu0 %v166
    %v298 = vpop.f32.mrf.mxu0
    %v299 = vadd.f32 %v89, %v298
    %v300 = vpop.f32.mrf.mxu0
    %v301 = vadd.f32 %v93, %v300
    %v302 = vpop.f32.mrf.mxu0
    %v303 = vadd.f32 %v89, %v302
    %v304 = vpop.f32.mrf.mxu0
    %v305 = vadd.f32 %v93, %v304
    %306 = vmatprep.mubr.bf16.mxu0 0
    %307 = vmatmul.mubr.bf16.gmra.mxu0 %v169
    %v308 = vpop.f32.mrf.mxu0
    %v309 = vadd.f32 %v89, %v308
    %v310 = vpop.f32.mrf.mxu0
    %v311 = vadd.f32 %v93, %v310
    %v312 = vpop.f32.mrf.mxu0
    %v313 = vadd.f32 %v89, %v312
    %v314 = vpop.f32.mrf.mxu0
    %v315 = vadd.f32 %v93, %v314
    %316 = vdwg.mxu0
    %317 = vst [vmem:[#allocation2] sm:$0xff] %v206
    %318 = vst [vmem:[#allocation2 + $0x8] sm:$0xff] %v208
    %319 = vst [vmem:[#allocation2 + $0x10] sm:$0xff] %v279
    %320 = vst [vmem:[#allocation2 + $0x18] sm:$0xff] %v281
    %321 = vst [vmem:[#allocation2 + $0x20] sm:$0xff] %v210
    %322 = vst [vmem:[#allocation2 + $0x28] sm:$0xff] %v212
    %323 = vst [vmem:[#allocation2 + $0x30] sm:$0xff] %v283
    %324 = vst [vmem:[#allocation2 + $0x38] sm:$0xff] %v285
    %325 = vst [vmem:[#allocation2 + $0x40] sm:$0xff] %v216
    %326 = vst [vmem:[#allocation2 + $0x48] sm:$0xff] %v218
    %327 = vst [vmem:[#allocation2 + $0x50] sm:$0xff] %v289
    %328 = vst [vmem:[#allocation2 + $0x58] sm:$0xff] %v291
    %329 = vst [vmem:[#allocation2 + $0x60] sm:$0xff] %v220
    %330 = vst [vmem:[#allocation2 + $0x68] sm:$0xff] %v222
    %331 = vst [vmem:[#allocation2 + $0x70] sm:$0xff] %v293
    %332 = vst [vmem:[#allocation2 + $0x78] sm:$0xff] %v295
    %333 = vst [vmem:[#allocation2 + $0x80] sm:$0xff] %v226
    %334 = vst [vmem:[#allocation2 + $0x88] sm:$0xff] %v228
    %335 = vst [vmem:[#allocation2 + $0x90] sm:$0xff] %v299
    %336 = vst [vmem:[#allocation2 + $0x98] sm:$0xff] %v301
    %337 = vst [vmem:[#allocation2 + $0xa0] sm:$0xff] %v230
    %338 = vst [vmem:[#allocation2 + $0xa8] sm:$0xff] %v232
    %339 = vst [vmem:[#allocation2 + $0xb0] sm:$0xff] %v303
    %340 = vst [vmem:[#allocation2 + $0xb8] sm:$0xff] %v305
    %341 = vst [vmem:[#allocation2 + $0xc0] sm:$0xff] %v236
    %342 = vst [vmem:[#allocation2 + $0xc8] sm:$0xff] %v238
    %343 = vst [vmem:[#allocation2 + $0xd0] sm:$0xff] %v309
    %344 = vst [vmem:[#allocation2 + $0xd8] sm:$0xff] %v311
    %345 = vst [vmem:[#allocation2 + $0xe0] sm:$0xff] %v240
    %346 = vst [vmem:[#allocation2 + $0xe8] sm:$0xff] %v242
    %347 = vst [vmem:[#allocation2 + $0xf0] sm:$0xff] %v313
    %348 = vst [vmem:[#allocation2 + $0xf8] sm:$0xff] %v315
    %v349 = vld [vmem:[#allocation8] sm:$0xff]
    %v350 = vld [vmem:[#allocation8 + $0x8] sm:$0xff]
    %v351 = vld [vmem:[#allocation8 + $0x10] sm:$0xff]
    %v352 = vld [vmem:[#allocation8 + $0x18] sm:$0xff]
    %v353 = vld [vmem:[#allocation8 + $0x20] sm:$0xff]
    %v354 = vld [vmem:[#allocation8 + $0x28] sm:$0xff]
    %v355 = vld [vmem:[#allocation8 + $0x30] sm:$0xff]
    %v356 = vld [vmem:[#allocation8 + $0x38] sm:$0xff]
    %v357 = vld [vmem:[#allocation8 + $0x40] sm:$0xff]
    %v358 = vld [vmem:[#allocation8 + $0x48] sm:$0xff]
    %v359 = vld [vmem:[#allocation8 + $0x50] sm:$0xff]
    %v360 = vld [vmem:[#allocation8 + $0x58] sm:$0xff]
    %v361 = vld [vmem:[#allocation8 + $0x60] sm:$0xff]
    %v362 = vld [vmem:[#allocation8 + $0x68] sm:$0xff]
    %v363 = vld [vmem:[#allocation8 + $0x70] sm:$0xff]
    %v364 = vld [vmem:[#allocation8 + $0x78] sm:$0xff]
    %v365 = vld [vmem:[#allocation8 + $0x80] sm:$0xff]
    %v366 = vld [vmem:[#allocation8 + $0x88] sm:$0xff]
    %v367 = vld [vmem:[#allocation8 + $0x90] sm:$0xff]
    %v368 = vld [vmem:[#allocation8 + $0x98] sm:$0xff]
    %v369 = vld [vmem:[#allocation8 + $0xa0] sm:$0xff]
    %v370 = vld [vmem:[#allocation8 + $0xa8] sm:$0xff]
    %v371 = vld [vmem:[#allocation8 + $0xb0] sm:$0xff]
    %v372 = vld [vmem:[#allocation8 + $0xb8] sm:$0xff]
    %v373 = vld [vmem:[#allocation8 + $0xc0] sm:$0xff]
    %v374 = vld [vmem:[#allocation8 + $0xc8] sm:$0xff]
    %v375 = vld [vmem:[#allocation8 + $0xd0] sm:$0xff]
    %v376 = vld [vmem:[#allocation8 + $0xd8] sm:$0xff]
    %v377 = vld [vmem:[#allocation8 + $0xe0] sm:$0xff]
    %v378 = vld [vmem:[#allocation8 + $0xe8] sm:$0xff]
    %v379 = vld [vmem:[#allocation8 + $0xf0] sm:$0xff]
    %v380 = vld [vmem:[#allocation8 + $0xf8] sm:$0xff]
    %s381 = smul.u32 0, 4
    %s382 = smul.addr %s381, 8
    %s383 = scalar_lea.vmem [#allocation2], %s382
    %v384 = vld [vmem:[%s383] sm:$0xff]
    %v385 = vld [vmem:[%s383 + $0x8] sm:$0xff]
    %v386 = vld [vmem:[%s383 + $0x10] sm:$0xff]
    %v387 = vld [vmem:[%s383 + $0x18] sm:$0xff]
    %v420 = vunpack.c.l.b16 %v349
    %v421 = vunpack.c.h.b16 %v349
    %v422 = vunpack.c.l.b16 %v350
    %v423 = vunpack.c.h.b16 %v350
    %v424 = vunpack.c.l.b16 %v351
    %v425 = vunpack.c.h.b16 %v351
    %v426 = vunpack.c.l.b16 %v352
    %v427 = vunpack.c.h.b16 %v352
    %v428 = vunpack.c.l.b16 %v353
    %v429 = vunpack.c.h.b16 %v353
    %v430 = vunpack.c.l.b16 %v354
    %v431 = vunpack.c.h.b16 %v354
    %v432 = vunpack.c.l.b16 %v355
    %v433 = vunpack.c.h.b16 %v355
    %v434 = vunpack.c.l.b16 %v356
    %v435 = vunpack.c.h.b16 %v356
    %v436 = vunpack.c.l.b16 %v357
    %v437 = vunpack.c.h.b16 %v357
    %v438 = vunpack.c.l.b16 %v358
    %v439 = vunpack.c.h.b16 %v358
    %v440 = vunpack.c.l.b16 %v359
    %v441 = vunpack.c.h.b16 %v359
    %v442 = vunpack.c.l.b16 %v360
    %v443 = vunpack.c.h.b16 %v360
    %v444 = vunpack.c.l.b16 %v361
    %v445 = vunpack.c.h.b16 %v361
    %v446 = vunpack.c.l.b16 %v362
    %v447 = vunpack.c.h.b16 %v362
    %v448 = vunpack.c.l.b16 %v363
    %v449 = vunpack.c.h.b16 %v363
    %v450 = vunpack.c.l.b16 %v364
    %v451 = vunpack.c.h.b16 %v364
    %v452 = vunpack.c.l.b16 %v365
    %v453 = vunpack.c.h.b16 %v365
    %v454 = vunpack.c.l.b16 %v366
    %v455 = vunpack.c.h.b16 %v366
    %v456 = vunpack.c.l.b16 %v367
    %v457 = vunpack.c.h.b16 %v367
    %v458 = vunpack.c.l.b16 %v368
    %v459 = vunpack.c.h.b16 %v368
    %v460 = vunpack.c.l.b16 %v369
    %v461 = vunpack.c.h.b16 %v369
    %v462 = vunpack.c.l.b16 %v370
    %v463 = vunpack.c.h.b16 %v370
    %v464 = vunpack.c.l.b16 %v371
    %v465 = vunpack.c.h.b16 %v371
    %v466 = vunpack.c.l.b16 %v372
    %v467 = vunpack.c.h.b16 %v372
    %v468 = vunpack.c.l.b16 %v373
    %v469 = vunpack.c.h.b16 %v373
    %v470 = vunpack.c.l.b16 %v374
    %v471 = vunpack.c.h.b16 %v374
    %v472 = vunpack.c.l.b16 %v375
    %v473 = vunpack.c.h.b16 %v375
    %v474 = vunpack.c.l.b16 %v376
    %v475 = vunpack.c.h.b16 %v376
    %v476 = vunpack.c.l.b16 %v377
    %v477 = vunpack.c.h.b16 %v377
    %v478 = vunpack.c.l.b16 %v378
    %v479 = vunpack.c.h.b16 %v378
    %v480 = vunpack.c.l.b16 %v379
    %v481 = vunpack.c.h.b16 %v379
    %v482 = vunpack.c.l.b16 %v380
    %v483 = vunpack.c.h.b16 %v380
    %v484 = vpack.c.b16 %v424, %v420
    %v485 = vpack.c.b16 %v425, %v421
    %v486 = vpack.c.b16 %v426, %v422
    %v487 = vpack.c.b16 %v427, %v423
    %v488 = vpack.c.b16 %v432, %v428
    %v489 = vpack.c.b16 %v433, %v429
    %v490 = vpack.c.b16 %v434, %v430
    %v491 = vpack.c.b16 %v435, %v431
    %v492 = vpack.c.b16 %v440, %v436
    %v493 = vpack.c.b16 %v441, %v437
    %v494 = vpack.c.b16 %v442, %v438
    %v495 = vpack.c.b16 %v443, %v439
    %v496 = vpack.c.b16 %v448, %v444
    %v497 = vpack.c.b16 %v449, %v445
    %v498 = vpack.c.b16 %v450, %v446
    %v499 = vpack.c.b16 %v451, %v447
    %v500 = vpack.c.b16 %v456, %v452
    %v501 = vpack.c.b16 %v457, %v453
    %v502 = vpack.c.b16 %v458, %v454
    %v503 = vpack.c.b16 %v459, %v455
    %v504 = vpack.c.b16 %v464, %v460
    %v505 = vpack.c.b16 %v465, %v461
    %v506 = vpack.c.b16 %v466, %v462
    %v507 = vpack.c.b16 %v467, %v463
    %v508 = vpack.c.b16 %v472, %v468
    %v509 = vpack.c.b16 %v473, %v469
    %v510 = vpack.c.b16 %v474, %v470
    %v511 = vpack.c.b16 %v475, %v471
    %v512 = vpack.c.b16 %v480, %v476
    %v513 = vpack.c.b16 %v481, %v477
    %v514 = vpack.c.b16 %v482, %v478
    %v515 = vpack.c.b16 %v483, %v479
    %548 = vmatprep.subr.bf16.mxu0 %v513
    %549 = vmatpush1.bf16.msra.mxu0 %v512
    %550 = vmatprep.subr.bf16.mxu0 %v509
    %551 = vmatpush1.bf16.msra.mxu0 %v508
    %552 = vmatprep.subr.bf16.mxu0 %v505
    %553 = vmatpush1.bf16.msra.mxu0 %v504
    %554 = vmatprep.subr.bf16.mxu0 %v501
    %555 = vmatpush1.bf16.msra.mxu0 %v500
    %556 = vmatprep.subr.bf16.mxu0 %v497
    %557 = vmatpush1.bf16.msra.mxu0 %v496
    %558 = vmatprep.subr.bf16.mxu0 %v493
    %559 = vmatpush1.bf16.msra.mxu0 %v492
    %560 = vmatprep.subr.bf16.mxu0 %v489
    %561 = vmatpush1.bf16.msra.mxu0 %v488
    %562 = vmatprep.subr.bf16.mxu0 %v485
    %563 = vmatpush1.bf16.msra.mxu0 %v484
    %564 = vmatprep.subr.bf16.mxu0 0
    %565 = vmatpush2.bf16.msra.mxu0 0
    %566 = vmatprep.subr.bf16.mxu0 0
    %567 = vmatpush2.bf16.msra.mxu0 0
    %568 = vmatprep.subr.bf16.mxu0 0
    %569 = vmatpush2.bf16.msra.mxu0 0
    %570 = vmatprep.subr.bf16.mxu0 0
    %571 = vmatpush2.bf16.msra.mxu0 0
    %572 = vmatprep.subr.bf16.mxu0 0
    %573 = vmatpush2.bf16.msra.mxu0 0
    %574 = vmatprep.subr.bf16.mxu0 0
    %575 = vmatpush2.bf16.msra.mxu0 0
    %576 = vmatprep.subr.bf16.mxu0 0
    %577 = vmatpush2.bf16.msra.mxu0 0
    %578 = vmatprep.subr.bf16.mxu0 0
    %579 = vmatpush2.bf16.msra.mxu0 0
    %580 = vmatprep.mubr.bf16.mxu0 0
    %581 = vmatmul.mubr.bf16.gmra.mxu0 0
    %v582 = vpop.f32.mrf.mxu0
    %v583 = vadd.f32 0.0, %v582
    %v584 = vpop.f32.mrf.mxu0
    %v585 = vadd.f32 0.0, %v584
    %v586 = vpop.f32.mrf.mxu0
    %v587 = vpop.f32.mrf.mxu0
    %588 = vdwg.mxu0
    %589 = vmatprep.subr.bf16.mxu0 %v515
    %590 = vmatpush1.bf16.msra.mxu0 %v514
    %591 = vmatprep.subr.bf16.mxu0 %v511
    %592 = vmatpush1.bf16.msra.mxu0 %v510
    %593 = vmatprep.subr.bf16.mxu0 %v507
    %594 = vmatpush1.bf16.msra.mxu0 %v506
    %595 = vmatprep.subr.bf16.mxu0 %v503
    %596 = vmatpush1.bf16.msra.mxu0 %v502
    %597 = vmatprep.subr.bf16.mxu0 %v499
    %598 = vmatpush1.bf16.msra.mxu0 %v498
    %599 = vmatprep.subr.bf16.mxu0 %v495
    %600 = vmatpush1.bf16.msra.mxu0 %v494
    %601 = vmatprep.subr.bf16.mxu0 %v491
    %602 = vmatpush1.bf16.msra.mxu0 %v490
    %603 = vmatprep.subr.bf16.mxu0 %v487
    %604 = vmatpush1.bf16.msra.mxu0 %v486
    %605 = vmatprep.subr.bf16.mxu0 0
    %606 = vmatpush2.bf16.msra.mxu0 0
    %607 = vmatprep.subr.bf16.mxu0 0
    %608 = vmatpush2.bf16.msra.mxu0 0
    %609 = vmatprep.subr.bf16.mxu0 0
    %610 = vmatpush2.bf16.msra.mxu0 0
    %611 = vmatprep.subr.bf16.mxu0 0
    %612 = vmatpush2.bf16.msra.mxu0 0
    %613 = vmatprep.subr.bf16.mxu0 0
    %614 = vmatpush2.bf16.msra.mxu0 0
    %615 = vmatprep.subr.bf16.mxu0 0
    %616 = vmatpush2.bf16.msra.mxu0 0
    %617 = vmatprep.subr.bf16.mxu0 0
    %618 = vmatpush2.bf16.msra.mxu0 0
    %619 = vmatprep.subr.bf16.mxu0 0
    %620 = vmatpush2.bf16.msra.mxu0 0
    %621 = vmatprep.mubr.bf16.mxu0 0
    %622 = vmatmul.mubr.bf16.gmra.mxu0 0
    %v623 = vpop.f32.mrf.mxu0
    %v624 = vadd.f32 0.0, %v623
    %v625 = vpop.f32.mrf.mxu0
    %v626 = vadd.f32 0.0, %v625
    %v627 = vpop.f32.mrf.mxu0
    %v628 = vpop.f32.mrf.mxu0
    %629 = vdwg.mxu0
    %v630 = vadd.f32 %v384, %v583
    %v631 = vadd.f32 %v385, %v585
    %v632 = vadd.f32 %v386, %v624
    %v633 = vadd.f32 %v387, %v626
    %v634 = vxor.u32 %v630, 2147483648
    %v635 = vxor.u32 %v631, 2147483648
    %v636 = vxor.u32 %v632, 2147483648
    %v637 = vmul.f32 %v634, 1.442695
    %v638 = vpow.pop %v637
    %v639 = vmul.f32 %v635, 1.442695
    %v640 = vpow.pop %v639
    %v641 = vmul.f32 %v636, 1.442695
    %v642 = vpow.pop %v641
    %v643 = vadd.f32 %v638, 1.0
    %v644 = vadd.f32 %v640, 1.0
    %v645 = vadd.f32 %v642, 1.0
    %v646 = vrcp.pop %v643
    %v647 = vmul.f32 1.0, %v646
    %v648 = vrcp.pop %v644
    %v649 = vmul.f32 1.0, %v648
    %v650 = vrcp.pop %v645
    %v651 = vmul.f32 1.0, %v650
    %v652 = vtanh.pop %v633
    %v653 = vmul.f32 %v649, 0.0
    %v654 = vmul.f32 %v647, %v652
    %v655 = vadd.f32 %v653, %v654
    %v656 = vtanh.pop %v655
    %v657 = vmul.f32 %v651, %v656
    %658 = vst [vmem:[#allocation9] sm:$0xff] %v657
    %v659 = vpack.c.bf16 %v657, %v657
    %s660 = smul.u32 1, 4
    %s661 = smul.addr %s660, 8
    %s662 = scalar_lea.vmem [#allocation2], %s661
    %v663 = vld [vmem:[%s662] sm:$0xff]
    %v664 = vld [vmem:[%s662 + $0x8] sm:$0xff]
    %v665 = vld [vmem:[%s662 + $0x10] sm:$0xff]
    %v666 = vld [vmem:[%s662 + $0x18] sm:$0xff]
    %667 = vmatprep.subr.bf16.mxu0 %v513
    %668 = vmatpush1.bf16.msra.mxu0 %v512
    %669 = vmatprep.subr.bf16.mxu0 %v509
    %670 = vmatpush1.bf16.msra.mxu0 %v508
    %671 = vmatprep.subr.bf16.mxu0 %v505
    %672 = vmatpush1.bf16.msra.mxu0 %v504
    %673 = vmatprep.subr.bf16.mxu0 %v501
    %674 = vmatpush1.bf16.msra.mxu0 %v500
    %675 = vmatprep.subr.bf16.mxu0 %v497
    %676 = vmatpush1.bf16.msra.mxu0 %v496
    %677 = vmatprep.subr.bf16.mxu0 %v493
    %678 = vmatpush1.bf16.msra.mxu0 %v492
    %679 = vmatprep.subr.bf16.mxu0 %v489
    %680 = vmatpush1.bf16.msra.mxu0 %v488
    %681 = vmatprep.subr.bf16.mxu0 %v485
    %682 = vmatpush1.bf16.msra.mxu0 %v484
    %683 = vmatprep.subr.bf16.mxu0 0
    %684 = vmatpush2.bf16.msra.mxu0 0
    %685 = vmatprep.subr.bf16.mxu0 0
    %686 = vmatpush2.bf16.msra.mxu0 0
    %687 = vmatprep.subr.bf16.mxu0 0
    %688 = vmatpush2.bf16.msra.mxu0 0
    %689 = vmatprep.subr.bf16.mxu0 0
    %690 = vmatpush2.bf16.msra.mxu0 0
    %691 = vmatprep.subr.bf16.mxu0 0
    %692 = vmatpush2.bf16.msra.mxu0 0
    %693 = vmatprep.subr.bf16.mxu0 0
    %694 = vmatpush2.bf16.msra.mxu0 0
    %695 = vmatprep.subr.bf16.mxu0 0
    %696 = vmatpush2.bf16.msra.mxu0 0
    %697 = vmatprep.subr.bf16.mxu0 0
    %698 = vmatpush2.bf16.msra.mxu0 0
    %699 = vmatprep.mubr.bf16.mxu0 0
    %700 = vmatmul.mubr.bf16.gmra.mxu0 %v659
    %v701 = vpop.f32.mrf.mxu0
    %v702 = vadd.f32 0.0, %v701
    %v703 = vpop.f32.mrf.mxu0
    %v704 = vadd.f32 0.0, %v703
    %v705 = vpop.f32.mrf.mxu0
    %v706 = vpop.f32.mrf.mxu0
    %707 = vdwg.mxu0
    %708 = vmatprep.subr.bf16.mxu0 %v515
    %709 = vmatpush1.bf16.msra.mxu0 %v514
    %710 = vmatprep.subr.bf16.mxu0 %v511
    %711 = vmatpush1.bf16.msra.mxu0 %v510
    %712 = vmatprep.subr.bf16.mxu0 %v507
    %713 = vmatpush1.bf16.msra.mxu0 %v506
    %714 = vmatprep.subr.bf16.mxu0 %v503
    %715 = vmatpush1.bf16.msra.mxu0 %v502
    %716 = vmatprep.subr.bf16.mxu0 %v499
    %717 = vmatpush1.bf16.msra.mxu0 %v498
    %718 = vmatprep.subr.bf16.mxu0 %v495
    %719 = vmatpush1.bf16.msra.mxu0 %v494
    %720 = vmatprep.subr.bf16.mxu0 %v491
    %721 = vmatpush1.bf16.msra.mxu0 %v490
    %722 = vmatprep.subr.bf16.mxu0 %v487
    %723 = vmatpush1.bf16.msra.mxu0 %v486
    %724 = vmatprep.subr.bf16.mxu0 0
    %725 = vmatpush2.bf16.msra.mxu0 0
    %726 = vmatprep.subr.bf16.mxu0 0
    %727 = vmatpush2.bf16.msra.mxu0 0
    %728 = vmatprep.subr.bf16.mxu0 0
    %729 = vmatpush2.bf16.msra.mxu0 0
    %730 = vmatprep.subr.bf16.mxu0 0
    %731 = vmatpush2.bf16.msra.mxu0 0
    %732 = vmatprep.subr.bf16.mxu0 0
    %733 = vmatpush2.bf16.msra.mxu0 0
    %734 = vmatprep.subr.bf16.mxu0 0
    %735 = vmatpush2.bf16.msra.mxu0 0
    %736 = vmatprep.subr.bf16.mxu0 0
    %737 = vmatpush2.bf16.msra.mxu0 0
    %738 = vmatprep.subr.bf16.mxu0 0
    %739 = vmatpush2.bf16.msra.mxu0 0
    %740 = vmatprep.mubr.bf16.mxu0 0
    %741 = vmatmul.mubr.bf16.gmra.mxu0 %v659
    %v742 = vpop.f32.mrf.mxu0
    %v743 = vadd.f32 0.0, %v742
    %v744 = vpop.f32.mrf.mxu0
    %v745 = vadd.f32 0.0, %v744
    %v746 = vpop.f32.mrf.mxu0
    %v747 = vpop.f32.mrf.mxu0
    %748 = vdwg.mxu0
    %v749 = vadd.f32 %v663, %v702
    %v750 = vadd.f32 %v664, %v704
    %v751 = vadd.f32 %v665, %v743
    %v752 = vadd.f32 %v666, %v745
    %v753 = vxor.u32 %v749, 2147483648
    %v754 = vxor.u32 %v750, 2147483648
    %v755 = vxor.u32 %v751, 2147483648
    %v756 = vmul.f32 %v753, 1.442695
    %v757 = vpow.pop %v756
    %v758 = vmul.f32 %v754, 1.442695
    %v759 = vpow.pop %v758
    %v760 = vmul.f32 %v755, 1.442695
    %v761 = vpow.pop %v760
    %v762 = vadd.f32 %v757, 1.0
    %v763 = vadd.f32 %v759, 1.0
    %v764 = vadd.f32 %v761, 1.0
    %v765 = vrcp.pop %v762
    %v766 = vmul.f32 1.0, %v765
    %v767 = vrcp.pop %v763
    %v768 = vmul.f32 1.0, %v767
    %v769 = vrcp.pop %v764
    %v770 = vmul.f32 1.0, %v769
    %v771 = vtanh.pop %v752
    %v772 = vmul.f32 %v768, %v655
    %v773 = vmul.f32 %v766, %v771
    %v774 = vadd.f32 %v772, %v773
    %v775 = vtanh.pop %v774
    %v776 = vmul.f32 %v770, %v775
    %s777 = scalar_lea.vmem [#allocation9], 8
    %778 = vst [vmem:[%s777] sm:$0xff] %v776
    %v779 = vpack.c.bf16 %v776, %v776
    %s780 = smul.u32 2, 4
    %s781 = smul.addr %s780, 8
    %s782 = scalar_lea.vmem [#allocation2], %s781
    %v783 = vld [vmem:[%s782] sm:$0xff]
    %v784 = vld [vmem:[%s782 + $0x8] sm:$0xff]
    %v785 = vld [vmem:[%s782 + $0x10] sm:$0xff]
    %v786 = vld [vmem:[%s782 + $0x18] sm:$0xff]
    %787 = vmatprep.subr.bf16.mxu0 %v513
    %788 = vmatpush1.bf16.msra.mxu0 %v512
    %789 = vmatprep.subr.bf16.mxu0 %v509
    %790 = vmatpush1.bf16.msra.mxu0 %v508
    %791 = vmatprep.subr.bf16.mxu0 %v505
    %792 = vmatpush1.bf16.msra.mxu0 %v504
    %793 = vmatprep.subr.bf16.mxu0 %v501
    %794 = vmatpush1.bf16.msra.mxu0 %v500
    %795 = vmatprep.subr.bf16.mxu0 %v497
    %796 = vmatpush1.bf16.msra.mxu0 %v496
    %797 = vmatprep.subr.bf16.mxu0 %v493
    %798 = vmatpush1.bf16.msra.mxu0 %v492
    %799 = vmatprep.subr.bf16.mxu0 %v489
    %800 = vmatpush1.bf16.msra.mxu0 %v488
    %801 = vmatprep.subr.bf16.mxu0 %v485
    %802 = vmatpush1.bf16.msra.mxu0 %v484
    %803 = vmatprep.subr.bf16.mxu0 0
    %804 = vmatpush2.bf16.msra.mxu0 0
    %805 = vmatprep.subr.bf16.mxu0 0
    %806 = vmatpush2.bf16.msra.mxu0 0
    %807 = vmatprep.subr.bf16.mxu0 0
    %808 = vmatpush2.bf16.msra.mxu0 0
    %809 = vmatprep.subr.bf16.mxu0 0
    %810 = vmatpush2.bf16.msra.mxu0 0
    %811 = vmatprep.subr.bf16.mxu0 0
    %812 = vmatpush2.bf16.msra.mxu0 0
    %813 = vmatprep.subr.bf16.mxu0 0
    %814 = vmatpush2.bf16.msra.mxu0 0
    %815 = vmatprep.subr.bf16.mxu0 0
    %816 = vmatpush2.bf16.msra.mxu0 0
    %817 = vmatprep.subr.bf16.mxu0 0
    %818 = vmatpush2.bf16.msra.mxu0 0
    %819 = vmatprep.mubr.bf16.mxu0 0
    %820 = vmatmul.mubr.bf16.gmra.mxu0 %v779
    %v821 = vpop.f32.mrf.mxu0
    %v822 = vadd.f32 0.0, %v821
    %v823 = vpop.f32.mrf.mxu0
    %v824 = vadd.f32 0.0, %v823
    %v825 = vpop.f32.mrf.mxu0
    %v826 = vpop.f32.mrf.mxu0
    %827 = vdwg.mxu0
    %828 = vmatprep.subr.bf16.mxu0 %v515
    %829 = vmatpush1.bf16.msra.mxu0 %v514
    %830 = vmatprep.subr.bf16.mxu0 %v511
    %831 = vmatpush1.bf16.msra.mxu0 %v510
    %832 = vmatprep.subr.bf16.mxu0 %v507
    %833 = vmatpush1.bf16.msra.mxu0 %v506
    %834 = vmatprep.subr.bf16.mxu0 %v503
    %835 = vmatpush1.bf16.msra.mxu0 %v502
    %836 = vmatprep.subr.bf16.mxu0 %v499
    %837 = vmatpush1.bf16.msra.mxu0 %v498
    %838 = vmatprep.subr.bf16.mxu0 %v495
    %839 = vmatpush1.bf16.msra.mxu0 %v494
    %840 = vmatprep.subr.bf16.mxu0 %v491
    %841 = vmatpush1.bf16.msra.mxu0 %v490
    %842 = vmatprep.subr.bf16.mxu0 %v487
    %843 = vmatpush1.bf16.msra.mxu0 %v486
    %844 = vmatprep.subr.bf16.mxu0 0
    %845 = vmatpush2.bf16.msra.mxu0 0
    %846 = vmatprep.subr.bf16.mxu0 0
    %847 = vmatpush2.bf16.msra.mxu0 0
    %848 = vmatprep.subr.bf16.mxu0 0
    %849 = vmatpush2.bf16.msra.mxu0 0
    %850 = vmatprep.subr.bf16.mxu0 0
    %851 = vmatpush2.bf16.msra.mxu0 0
    %852 = vmatprep.subr.bf16.mxu0 0
    %853 = vmatpush2.bf16.msra.mxu0 0
    %854 = vmatprep.subr.bf16.mxu0 0
    %855 = vmatpush2.bf16.msra.mxu0 0
    %856 = vmatprep.subr.bf16.mxu0 0
    %857 = vmatpush2.bf16.msra.mxu0 0
    %858 = vmatprep.subr.bf16.mxu0 0
    %859 = vmatpush2.bf16.msra.mxu0 0
    %860 = vmatprep.mubr.bf16.mxu0 0
    %861 = vmatmul.mubr.bf16.gmra.mxu0 %v779
    %v862 = vpop.f32.mrf.mxu0
    %v863 = vadd.f32 0.0, %v862
    %v864 = vpop.f32.mrf.mxu0
    %v865 = vadd.f32 0.0, %v864
    %v866 = vpop.f32.mrf.mxu0
    %v867 = vpop.f32.mrf.mxu0
    %868 = vdwg.mxu0
    %v869 = vadd.f32 %v783, %v822
    %v870 = vadd.f32 %v784, %v824
    %v871 = vadd.f32 %v785, %v863
    %v872 = vadd.f32 %v786, %v865
    %v873 = vxor.u32 %v869, 2147483648
    %v874 = vxor.u32 %v870, 2147483648
    %v875 = vxor.u32 %v871, 2147483648
    %v876 = vmul.f32 %v873, 1.442695
    %v877 = vpow.pop %v876
    %v878 = vmul.f32 %v874, 1.442695
    %v879 = vpow.pop %v878
    %v880 = vmul.f32 %v875, 1.442695
    %v881 = vpow.pop %v880
    %v882 = vadd.f32 %v877, 1.0
    %v883 = vadd.f32 %v879, 1.0
    %v884 = vadd.f32 %v881, 1.0
    %v885 = vrcp.pop %v882
    %v886 = vmul.f32 1.0, %v885
    %v887 = vrcp.pop %v883
    %v888 = vmul.f32 1.0, %v887
    %v889 = vrcp.pop %v884
    %v890 = vmul.f32 1.0, %v889
    %v891 = vtanh.pop %v872
    %v892 = vmul.f32 %v888, %v774
    %v893 = vmul.f32 %v886, %v891
    %v894 = vadd.f32 %v892, %v893
    %v895 = vtanh.pop %v894
    %v896 = vmul.f32 %v890, %v895
    %s897 = scalar_lea.vmem [#allocation9], 16
    %898 = vst [vmem:[%s897] sm:$0xff] %v896
    %v899 = vpack.c.bf16 %v896, %v896
    %s900 = smul.u32 3, 4
    %s901 = smul.addr %s900, 8
    %s902 = scalar_lea.vmem [#allocation2], %s901
    %v903 = vld [vmem:[%s902] sm:$0xff]
    %v904 = vld [vmem:[%s902 + $0x8] sm:$0xff]
    %v905 = vld [vmem:[%s902 + $0x10] sm:$0xff]
    %v906 = vld [vmem:[%s902 + $0x18] sm:$0xff]
    %907 = vmatprep.subr.bf16.mxu0 %v513
    %908 = vmatpush1.bf16.msra.mxu0 %v512
    %909 = vmatprep.subr.bf16.mxu0 %v509
    %910 = vmatpush1.bf16.msra.mxu0 %v508
    %911 = vmatprep.subr.bf16.mxu0 %v505
    %912 = vmatpush1.bf16.msra.mxu0 %v504
    %913 = vmatprep.subr.bf16.mxu0 %v501
    %914 = vmatpush1.bf16.msra.mxu0 %v500
    %915 = vmatprep.subr.bf16.mxu0 %v497
    %916 = vmatpush1.bf16.msra.mxu0 %v496
    %917 = vmatprep.subr.bf16.mxu0 %v493
    %918 = vmatpush1.bf16.msra.mxu0 %v492
    %919 = vmatprep.subr.bf16.mxu0 %v489
    %920 = vmatpush1.bf16.msra.mxu0 %v488
    %921 = vmatprep.subr.bf16.mxu0 %v485
    %922 = vmatpush1.bf16.msra.mxu0 %v484
    %923 = vmatprep.subr.bf16.mxu0 0
    %924 = vmatpush2.bf16.msra.mxu0 0
    %925 = vmatprep.subr.bf16.mxu0 0
    %926 = vmatpush2.bf16.msra.mxu0 0
    %927 = vmatprep.subr.bf16.mxu0 0
    %928 = vmatpush2.bf16.msra.mxu0 0
    %929 = vmatprep.subr.bf16.mxu0 0
    %930 = vmatpush2.bf16.msra.mxu0 0
    %931 = vmatprep.subr.bf16.mxu0 0
    %932 = vmatpush2.bf16.msra.mxu0 0
    %933 = vmatprep.subr.bf16.mxu0 0
    %934 = vmatpush2.bf16.msra.mxu0 0
    %935 = vmatprep.subr.bf16.mxu0 0
    %936 = vmatpush2.bf16.msra.mxu0 0
    %937 = vmatprep.subr.bf16.mxu0 0
    %938 = vmatpush2.bf16.msra.mxu0 0
    %939 = vmatprep.mubr.bf16.mxu0 0
    %940 = vmatmul.mubr.bf16.gmra.mxu0 %v899
    %v941 = vpop.f32.mrf.mxu0
    %v942 = vadd.f32 0.0, %v941
    %v943 = vpop.f32.mrf.mxu0
    %v944 = vadd.f32 0.0, %v943
    %v945 = vpop.f32.mrf.mxu0
    %v946 = vpop.f32.mrf.mxu0
    %947 = vdwg.mxu0
    %948 = vmatprep.subr.bf16.mxu0 %v515
    %949 = vmatpush1.bf16.msra.mxu0 %v514
    %950 = vmatprep.subr.bf16.mxu0 %v511
    %951 = vmatpush1.bf16.msra.mxu0 %v510
    %952 = vmatprep.subr.bf16.mxu0 %v507
    %953 = vmatpush1.bf16.msra.mxu0 %v506
    %954 = vmatprep.subr.bf16.mxu0 %v503
    %955 = vmatpush1.bf16.msra.mxu0 %v502
    %956 = vmatprep.subr.bf16.mxu0 %v499
    %957 = vmatpush1.bf16.msra.mxu0 %v498
    %958 = vmatprep.subr.bf16.mxu0 %v495
    %959 = vmatpush1.bf16.msra.mxu0 %v494
    %960 = vmatprep.subr.bf16.mxu0 %v491
    %961 = vmatpush1.bf16.msra.mxu0 %v490
    %962 = vmatprep.subr.bf16.mxu0 %v487
    %963 = vmatpush1.bf16.msra.mxu0 %v486
    %964 = vmatprep.subr.bf16.mxu0 0
    %965 = vmatpush2.bf16.msra.mxu0 0
    %966 = vmatprep.subr.bf16.mxu0 0
    %967 = vmatpush2.bf16.msra.mxu0 0
    %968 = vmatprep.subr.bf16.mxu0 0
    %969 = vmatpush2.bf16.msra.mxu0 0
    %970 = vmatprep.subr.bf16.mxu0 0
    %971 = vmatpush2.bf16.msra.mxu0 0
    %972 = vmatprep.subr.bf16.mxu0 0
    %973 = vmatpush2.bf16.msra.mxu0 0
    %974 = vmatprep.subr.bf16.mxu0 0
    %975 = vmatpush2.bf16.msra.mxu0 0
    %976 = vmatprep.subr.bf16.mxu0 0
    %977 = vmatpush2.bf16.msra.mxu0 0
    %978 = vmatprep.subr.bf16.mxu0 0
    %979 = vmatpush2.bf16.msra.mxu0 0
    %980 = vmatprep.mubr.bf16.mxu0 0
    %981 = vmatmul.mubr.bf16.gmra.mxu0 %v899
    %v982 = vpop.f32.mrf.mxu0
    %v983 = vadd.f32 0.0, %v982
    %v984 = vpop.f32.mrf.mxu0
    %v985 = vadd.f32 0.0, %v984
    %v986 = vpop.f32.mrf.mxu0
    %v987 = vpop.f32.mrf.mxu0
    %988 = vdwg.mxu0
    %v989 = vadd.f32 %v903, %v942
    %v990 = vadd.f32 %v904, %v944
    %v991 = vadd.f32 %v905, %v983
    %v992 = vadd.f32 %v906, %v985
    %v993 = vxor.u32 %v989, 2147483648
    %v994 = vxor.u32 %v990, 2147483648
    %v995 = vxor.u32 %v991, 2147483648
    %v996 = vmul.f32 %v993, 1.442695
    %v997 = vpow.pop %v996
    %v998 = vmul.f32 %v994, 1.442695
    %v999 = vpow.pop %v998
    %v1000 = vmul.f32 %v995, 1.442695
    %v1001 = vpow.pop %v1000
    %v1002 = vadd.f32 %v997, 1.0
    %v1003 = vadd.f32 %v999, 1.0
    %v1004 = vadd.f32 %v1001, 1.0
    %v1005 = vrcp.pop %v1002
    %v1006 = vmul.f32 1.0, %v1005
    %v1007 = vrcp.pop %v1003
    %v1008 = vmul.f32 1.0, %v1007
    %v1009 = vrcp.pop %v1004
    %v1010 = vmul.f32 1.0, %v1009
    %v1011 = vtanh.pop %v992
    %v1012 = vmul.f32 %v1008, %v894
    %v1013 = vmul.f32 %v1006, %v1011
    %v1014 = vadd.f32 %v1012, %v1013
    %v1015 = vtanh.pop %v1014
    %v1016 = vmul.f32 %v1010, %v1015
    %s1017 = scalar_lea.vmem [#allocation9], 24
    %1018 = vst [vmem:[%s1017] sm:$0xff] %v1016
    %v1019 = vpack.c.bf16 %v1016, %v1016
    %s1020 = smul.u32 4, 4
    %s1021 = smul.addr %s1020, 8
    %s1022 = scalar_lea.vmem [#allocation2], %s1021
    %v1023 = vld [vmem:[%s1022] sm:$0xff]
    %v1024 = vld [vmem:[%s1022 + $0x8] sm:$0xff]
    %v1025 = vld [vmem:[%s1022 + $0x10] sm:$0xff]
    %v1026 = vld [vmem:[%s1022 + $0x18] sm:$0xff]
    %1027 = vmatprep.subr.bf16.mxu0 %v513
    %1028 = vmatpush1.bf16.msra.mxu0 %v512
    %1029 = vmatprep.subr.bf16.mxu0 %v509
    %1030 = vmatpush1.bf16.msra.mxu0 %v508
    %1031 = vmatprep.subr.bf16.mxu0 %v505
    %1032 = vmatpush1.bf16.msra.mxu0 %v504
    %1033 = vmatprep.subr.bf16.mxu0 %v501
    %1034 = vmatpush1.bf16.msra.mxu0 %v500
    %1035 = vmatprep.subr.bf16.mxu0 %v497
    %1036 = vmatpush1.bf16.msra.mxu0 %v496
    %1037 = vmatprep.subr.bf16.mxu0 %v493
    %1038 = vmatpush1.bf16.msra.mxu0 %v492
    %1039 = vmatprep.subr.bf16.mxu0 %v489
    %1040 = vmatpush1.bf16.msra.mxu0 %v488
    %1041 = vmatprep.subr.bf16.mxu0 %v485
    %1042 = vmatpush1.bf16.msra.mxu0 %v484
    %1043 = vmatprep.subr.bf16.mxu0 0
    %1044 = vmatpush2.bf16.msra.mxu0 0
    %1045 = vmatprep.subr.bf16.mxu0 0
    %1046 = vmatpush2.bf16.msra.mxu0 0
    %1047 = vmatprep.subr.bf16.mxu0 0
    %1048 = vmatpush2.bf16.msra.mxu0 0
    %1049 = vmatprep.subr.bf16.mxu0 0
    %1050 = vmatpush2.bf16.msra.mxu0 0
    %1051 = vmatprep.subr.bf16.mxu0 0
    %1052 = vmatpush2.bf16.msra.mxu0 0
    %1053 = vmatprep.subr.bf16.mxu0 0
    %1054 = vmatpush2.bf16.msra.mxu0 0
    %1055 = vmatprep.subr.bf16.mxu0 0
    %1056 = vmatpush2.bf16.msra.mxu0 0
    %1057 = vmatprep.subr.bf16.mxu0 0
    %1058 = vmatpush2.bf16.msra.mxu0 0
    %1059 = vmatprep.mubr.bf16.mxu0 0
    %1060 = vmatmul.mubr.bf16.gmra.mxu0 %v1019
    %v1061 = vpop.f32.mrf.mxu0
    %v1062 = vadd.f32 0.0, %v1061
    %v1063 = vpop.f32.mrf.mxu0
    %v1064 = vadd.f32 0.0, %v1063
    %v1065 = vpop.f32.mrf.mxu0
    %v1066 = vpop.f32.mrf.mxu0
    %1067 = vdwg.mxu0
    %1068 = vmatprep.subr.bf16.mxu0 %v515
    %1069 = vmatpush1.bf16.msra.mxu0 %v514
    %1070 = vmatprep.subr.bf16.mxu0 %v511
    %1071 = vmatpush1.bf16.msra.mxu0 %v510
    %1072 = vmatprep.subr.bf16.mxu0 %v507
    %1073 = vmatpush1.bf16.msra.mxu0 %v506
    %1074 = vmatprep.subr.bf16.mxu0 %v503
    %1075 = vmatpush1.bf16.msra.mxu0 %v502
    %1076 = vmatprep.subr.bf16.mxu0 %v499
    %1077 = vmatpush1.bf16.msra.mxu0 %v498
    %1078 = vmatprep.subr.bf16.mxu0 %v495
    %1079 = vmatpush1.bf16.msra.mxu0 %v494
    %1080 = vmatprep.subr.bf16.mxu0 %v491
    %1081 = vmatpush1.bf16.msra.mxu0 %v490
    %1082 = vmatprep.subr.bf16.mxu0 %v487
    %1083 = vmatpush1.bf16.msra.mxu0 %v486
    %1084 = vmatprep.subr.bf16.mxu0 0
    %1085 = vmatpush2.bf16.msra.mxu0 0
    %1086 = vmatprep.subr.bf16.mxu0 0
    %1087 = vmatpush2.bf16.msra.mxu0 0
    %1088 = vmatprep.subr.bf16.mxu0 0
    %1089 = vmatpush2.bf16.msra.mxu0 0
    %1090 = vmatprep.subr.bf16.mxu0 0
    %1091 = vmatpush2.bf16.msra.mxu0 0
    %1092 = vmatprep.subr.bf16.mxu0 0
    %1093 = vmatpush2.bf16.msra.mxu0 0
    %1094 = vmatprep.subr.bf16.mxu0 0
    %1095 = vmatpush2.bf16.msra.mxu0 0
    %1096 = vmatprep.subr.bf16.mxu0 0
    %1097 = vmatpush2.bf16.msra.mxu0 0
    %1098 = vmatprep.subr.bf16.mxu0 0
    %1099 = vmatpush2.bf16.msra.mxu0 0
    %1100 = vmatprep.mubr.bf16.mxu0 0
    %1101 = vmatmul.mubr.bf16.gmra.mxu0 %v1019
    %v1102 = vpop.f32.mrf.mxu0
    %v1103 = vadd.f32 0.0, %v1102
    %v1104 = vpop.f32.mrf.mxu0
    %v1105 = vadd.f32 0.0, %v1104
    %v1106 = vpop.f32.mrf.mxu0
    %v1107 = vpop.f32.mrf.mxu0
    %1108 = vdwg.mxu0
    %v1109 = vadd.f32 %v1023, %v1062
    %v1110 = vadd.f32 %v1024, %v1064
    %v1111 = vadd.f32 %v1025, %v1103
    %v1112 = vadd.f32 %v1026, %v1105
    %v1113 = vxor.u32 %v1109, 2147483648
    %v1114 = vxor.u32 %v1110, 2147483648
    %v1115 = vxor.u32 %v1111, 2147483648
    %v1116 = vmul.f32 %v1113, 1.442695
    %v1117 = vpow.pop %v1116
    %v1118 = vmul.f32 %v1114, 1.442695
    %v1119 = vpow.pop %v1118
    %v1120 = vmul.f32 %v1115, 1.442695
    %v1121 = vpow.pop %v1120
    %v1122 = vadd.f32 %v1117, 1.0
    %v1123 = vadd.f32 %v1119, 1.0
    %v1124 = vadd.f32 %v1121, 1.0
    %v1125 = vrcp.pop %v1122
    %v1126 = vmul.f32 1.0, %v1125
    %v1127 = vrcp.pop %v1123
    %v1128 = vmul.f32 1.0, %v1127
    %v1129 = vrcp.pop %v1124
    %v1130 = vmul.f32 1.0, %v1129
    %v1131 = vtanh.pop %v1112
    %v1132 = vmul.f32 %v1128, %v1014
    %v1133 = vmul.f32 %v1126, %v1131
    %v1134 = vadd.f32 %v1132, %v1133
    %v1135 = vtanh.pop %v1134
    %v1136 = vmul.f32 %v1130, %v1135
    %s1137 = scalar_lea.vmem [#allocation9], 32
    %1138 = vst [vmem:[%s1137] sm:$0xff] %v1136
    %v1139 = vpack.c.bf16 %v1136, %v1136
    %s1140 = smul.u32 5, 4
    %s1141 = smul.addr %s1140, 8
    %s1142 = scalar_lea.vmem [#allocation2], %s1141
    %v1143 = vld [vmem:[%s1142] sm:$0xff]
    %v1144 = vld [vmem:[%s1142 + $0x8] sm:$0xff]
    %v1145 = vld [vmem:[%s1142 + $0x10] sm:$0xff]
    %v1146 = vld [vmem:[%s1142 + $0x18] sm:$0xff]
    %1147 = vmatprep.subr.bf16.mxu0 %v513
    %1148 = vmatpush1.bf16.msra.mxu0 %v512
    %1149 = vmatprep.subr.bf16.mxu0 %v509
    %1150 = vmatpush1.bf16.msra.mxu0 %v508
    %1151 = vmatprep.subr.bf16.mxu0 %v505
    %1152 = vmatpush1.bf16.msra.mxu0 %v504
    %1153 = vmatprep.subr.bf16.mxu0 %v501
    %1154 = vmatpush1.bf16.msra.mxu0 %v500
    %1155 = vmatprep.subr.bf16.mxu0 %v497
    %1156 = vmatpush1.bf16.msra.mxu0 %v496
    %1157 = vmatprep.subr.bf16.mxu0 %v493
    %1158 = vmatpush1.bf16.msra.mxu0 %v492
    %1159 = vmatprep.subr.bf16.mxu0 %v489
    %1160 = vmatpush1.bf16.msra.mxu0 %v488
    %1161 = vmatprep.subr.bf16.mxu0 %v485
    %1162 = vmatpush1.bf16.msra.mxu0 %v484
    %1163 = vmatprep.subr.bf16.mxu0 0
    %1164 = vmatpush2.bf16.msra.mxu0 0
    %1165 = vmatprep.subr.bf16.mxu0 0
    %1166 = vmatpush2.bf16.msra.mxu0 0
    %1167 = vmatprep.subr.bf16.mxu0 0
    %1168 = vmatpush2.bf16.msra.mxu0 0
    %1169 = vmatprep.subr.bf16.mxu0 0
    %1170 = vmatpush2.bf16.msra.mxu0 0
    %1171 = vmatprep.subr.bf16.mxu0 0
    %1172 = vmatpush2.bf16.msra.mxu0 0
    %1173 = vmatprep.subr.bf16.mxu0 0
    %1174 = vmatpush2.bf16.msra.mxu0 0
    %1175 = vmatprep.subr.bf16.mxu0 0
    %1176 = vmatpush2.bf16.msra.mxu0 0
    %1177 = vmatprep.subr.bf16.mxu0 0
    %1178 = vmatpush2.bf16.msra.mxu0 0
    %1179 = vmatprep.mubr.bf16.mxu0 0
    %1180 = vmatmul.mubr.bf16.gmra.mxu0 %v1139
    %v1181 = vpop.f32.mrf.mxu0
    %v1182 = vadd.f32 0.0, %v1181
    %v1183 = vpop.f32.mrf.mxu0
    %v1184 = vadd.f32 0.0, %v1183
    %v1185 = vpop.f32.mrf.mxu0
    %v1186 = vpop.f32.mrf.mxu0
    %1187 = vdwg.mxu0
    %1188 = vmatprep.subr.bf16.mxu0 %v515
    %1189 = vmatpush1.bf16.msra.mxu0 %v514
    %1190 = vmatprep.subr.bf16.mxu0 %v511
    %1191 = vmatpush1.bf16.msra.mxu0 %v510
    %1192 = vmatprep.subr.bf16.mxu0 %v507
    %1193 = vmatpush1.bf16.msra.mxu0 %v506
    %1194 = vmatprep.subr.bf16.mxu0 %v503
    %1195 = vmatpush1.bf16.msra.mxu0 %v502
    %1196 = vmatprep.subr.bf16.mxu0 %v499
    %1197 = vmatpush1.bf16.msra.mxu0 %v498
    %1198 = vmatprep.subr.bf16.mxu0 %v495
    %1199 = vmatpush1.bf16.msra.mxu0 %v494
    %1200 = vmatprep.subr.bf16.mxu0 %v491
    %1201 = vmatpush1.bf16.msra.mxu0 %v490
    %1202 = vmatprep.subr.bf16.mxu0 %v487
    %1203 = vmatpush1.bf16.msra.mxu0 %v486
    %1204 = vmatprep.subr.bf16.mxu0 0
    %1205 = vmatpush2.bf16.msra.mxu0 0
    %1206 = vmatprep.subr.bf16.mxu0 0
    %1207 = vmatpush2.bf16.msra.mxu0 0
    %1208 = vmatprep.subr.bf16.mxu0 0
    %1209 = vmatpush2.bf16.msra.mxu0 0
    %1210 = vmatprep.subr.bf16.mxu0 0
    %1211 = vmatpush2.bf16.msra.mxu0 0
    %1212 = vmatprep.subr.bf16.mxu0 0
    %1213 = vmatpush2.bf16.msra.mxu0 0
    %1214 = vmatprep.subr.bf16.mxu0 0
    %1215 = vmatpush2.bf16.msra.mxu0 0
    %1216 = vmatprep.subr.bf16.mxu0 0
    %1217 = vmatpush2.bf16.msra.mxu0 0
    %1218 = vmatprep.subr.bf16.mxu0 0
    %1219 = vmatpush2.bf16.msra.mxu0 0
    %1220 = vmatprep.mubr.bf16.mxu0 0
    %1221 = vmatmul.mubr.bf16.gmra.mxu0 %v1139
    %v1222 = vpop.f32.mrf.mxu0
    %v1223 = vadd.f32 0.0, %v1222
    %v1224 = vpop.f32.mrf.mxu0
    %v1225 = vadd.f32 0.0, %v1224
    %v1226 = vpop.f32.mrf.mxu0
    %v1227 = vpop.f32.mrf.mxu0
    %1228 = vdwg.mxu0
    %v1229 = vadd.f32 %v1143, %v1182
    %v1230 = vadd.f32 %v1144, %v1184
    %v1231 = vadd.f32 %v1145, %v1223
    %v1232 = vadd.f32 %v1146, %v1225
    %v1233 = vxor.u32 %v1229, 2147483648
    %v1234 = vxor.u32 %v1230, 2147483648
    %v1235 = vxor.u32 %v1231, 2147483648
    %v1236 = vmul.f32 %v1233, 1.442695
    %v1237 = vpow.pop %v1236
    %v1238 = vmul.f32 %v1234, 1.442695
    %v1239 = vpow.pop %v1238
    %v1240 = vmul.f32 %v1235, 1.442695
    %v1241 = vpow.pop %v1240
    %v1242 = vadd.f32 %v1237, 1.0
    %v1243 = vadd.f32 %v1239, 1.0
    %v1244 = vadd.f32 %v1241, 1.0
    %v1245 = vrcp.pop %v1242
    %v1246 = vmul.f32 1.0, %v1245
    %v1247 = vrcp.pop %v1243
    %v1248 = vmul.f32 1.0, %v1247
    %v1249 = vrcp.pop %v1244
    %v1250 = vmul.f32 1.0, %v1249
    %v1251 = vtanh.pop %v1232
    %v1252 = vmul.f32 %v1248, %v1134
    %v1253 = vmul.f32 %v1246, %v1251
    %v1254 = vadd.f32 %v1252, %v1253
    %v1255 = vtanh.pop %v1254
    %v1256 = vmul.f32 %v1250, %v1255
    %s1257 = scalar_lea.vmem [#allocation9], 40
    %1258 = vst [vmem:[%s1257] sm:$0xff] %v1256
    %v1259 = vpack.c.bf16 %v1256, %v1256
    %s1260 = smul.u32 6, 4
    %s1261 = smul.addr %s1260, 8
    %s1262 = scalar_lea.vmem [#allocation2], %s1261
    %v1263 = vld [vmem:[%s1262] sm:$0xff]
    %v1264 = vld [vmem:[%s1262 + $0x8] sm:$0xff]
    %v1265 = vld [vmem:[%s1262 + $0x10] sm:$0xff]
    %v1266 = vld [vmem:[%s1262 + $0x18] sm:$0xff]
    %1267 = vmatprep.subr.bf16.mxu0 %v513
    %1268 = vmatpush1.bf16.msra.mxu0 %v512
    %1269 = vmatprep.subr.bf16.mxu0 %v509
    %1270 = vmatpush1.bf16.msra.mxu0 %v508
    %1271 = vmatprep.subr.bf16.mxu0 %v505
    %1272 = vmatpush1.bf16.msra.mxu0 %v504
    %1273 = vmatprep.subr.bf16.mxu0 %v501
    %1274 = vmatpush1.bf16.msra.mxu0 %v500
    %1275 = vmatprep.subr.bf16.mxu0 %v497
    %1276 = vmatpush1.bf16.msra.mxu0 %v496
    %1277 = vmatprep.subr.bf16.mxu0 %v493
    %1278 = vmatpush1.bf16.msra.mxu0 %v492
    %1279 = vmatprep.subr.bf16.mxu0 %v489
    %1280 = vmatpush1.bf16.msra.mxu0 %v488
    %1281 = vmatprep.subr.bf16.mxu0 %v485
    %1282 = vmatpush1.bf16.msra.mxu0 %v484
    %1283 = vmatprep.subr.bf16.mxu0 0
    %1284 = vmatpush2.bf16.msra.mxu0 0
    %1285 = vmatprep.subr.bf16.mxu0 0
    %1286 = vmatpush2.bf16.msra.mxu0 0
    %1287 = vmatprep.subr.bf16.mxu0 0
    %1288 = vmatpush2.bf16.msra.mxu0 0
    %1289 = vmatprep.subr.bf16.mxu0 0
    %1290 = vmatpush2.bf16.msra.mxu0 0
    %1291 = vmatprep.subr.bf16.mxu0 0
    %1292 = vmatpush2.bf16.msra.mxu0 0
    %1293 = vmatprep.subr.bf16.mxu0 0
    %1294 = vmatpush2.bf16.msra.mxu0 0
    %1295 = vmatprep.subr.bf16.mxu0 0
    %1296 = vmatpush2.bf16.msra.mxu0 0
    %1297 = vmatprep.subr.bf16.mxu0 0
    %1298 = vmatpush2.bf16.msra.mxu0 0
    %1299 = vmatprep.mubr.bf16.mxu0 0
    %1300 = vmatmul.mubr.bf16.gmra.mxu0 %v1259
    %v1301 = vpop.f32.mrf.mxu0
    %v1302 = vadd.f32 0.0, %v1301
    %v1303 = vpop.f32.mrf.mxu0
    %v1304 = vadd.f32 0.0, %v1303
    %v1305 = vpop.f32.mrf.mxu0
    %v1306 = vpop.f32.mrf.mxu0
    %1307 = vdwg.mxu0
    %1308 = vmatprep.subr.bf16.mxu0 %v515
    %1309 = vmatpush1.bf16.msra.mxu0 %v514
    %1310 = vmatprep.subr.bf16.mxu0 %v511
    %1311 = vmatpush1.bf16.msra.mxu0 %v510
    %1312 = vmatprep.subr.bf16.mxu0 %v507
    %1313 = vmatpush1.bf16.msra.mxu0 %v506
    %1314 = vmatprep.subr.bf16.mxu0 %v503
    %1315 = vmatpush1.bf16.msra.mxu0 %v502
    %1316 = vmatprep.subr.bf16.mxu0 %v499
    %1317 = vmatpush1.bf16.msra.mxu0 %v498
    %1318 = vmatprep.subr.bf16.mxu0 %v495
    %1319 = vmatpush1.bf16.msra.mxu0 %v494
    %1320 = vmatprep.subr.bf16.mxu0 %v491
    %1321 = vmatpush1.bf16.msra.mxu0 %v490
    %1322 = vmatprep.subr.bf16.mxu0 %v487
    %1323 = vmatpush1.bf16.msra.mxu0 %v486
    %1324 = vmatprep.subr.bf16.mxu0 0
    %1325 = vmatpush2.bf16.msra.mxu0 0
    %1326 = vmatprep.subr.bf16.mxu0 0
    %1327 = vmatpush2.bf16.msra.mxu0 0
    %1328 = vmatprep.subr.bf16.mxu0 0
    %1329 = vmatpush2.bf16.msra.mxu0 0
    %1330 = vmatprep.subr.bf16.mxu0 0
    %1331 = vmatpush2.bf16.msra.mxu0 0
    %1332 = vmatprep.subr.bf16.mxu0 0
    %1333 = vmatpush2.bf16.msra.mxu0 0
    %1334 = vmatprep.subr.bf16.mxu0 0
    %1335 = vmatpush2.bf16.msra.mxu0 0
    %1336 = vmatprep.subr.bf16.mxu0 0
    %1337 = vmatpush2.bf16.msra.mxu0 0
    %1338 = vmatprep.subr.bf16.mxu0 0
    %1339 = vmatpush2.bf16.msra.mxu0 0
    %1340 = vmatprep.mubr.bf16.mxu0 0
    %1341 = vmatmul.mubr.bf16.gmra.mxu0 %v1259
    %v1342 = vpop.f32.mrf.mxu0
    %v1343 = vadd.f32 0.0, %v1342
    %v1344 = vpop.f32.mrf.mxu0
    %v1345 = vadd.f32 0.0, %v1344
    %v1346 = vpop.f32.mrf.mxu0
    %v1347 = vpop.f32.mrf.mxu0
    %1348 = vdwg.mxu0
    %v1349 = vadd.f32 %v1263, %v1302
    %v1350 = vadd.f32 %v1264, %v1304
    %v1351 = vadd.f32 %v1265, %v1343
    %v1352 = vadd.f32 %v1266, %v1345
    %v1353 = vxor.u32 %v1349, 2147483648
    %v1354 = vxor.u32 %v1350, 2147483648
    %v1355 = vxor.u32 %v1351, 2147483648
    %v1356 = vmul.f32 %v1353, 1.442695
    %v1357 = vpow.pop %v1356
    %v1358 = vmul.f32 %v1354, 1.442695
    %v1359 = vpow.pop %v1358
    %v1360 = vmul.f32 %v1355, 1.442695
    %v1361 = vpow.pop %v1360
    %v1362 = vadd.f32 %v1357, 1.0
    %v1363 = vadd.f32 %v1359, 1.0
    %v1364 = vadd.f32 %v1361, 1.0
    %v1365 = vrcp.pop %v1362
    %v1366 = vmul.f32 1.0, %v1365
    %v1367 = vrcp.pop %v1363
    %v1368 = vmul.f32 1.0, %v1367
    %v1369 = vrcp.pop %v1364
    %v1370 = vmul.f32 1.0, %v1369
    %v1371 = vtanh.pop %v1352
    %v1372 = vmul.f32 %v1368, %v1254
    %v1373 = vmul.f32 %v1366, %v1371
    %v1374 = vadd.f32 %v1372, %v1373
    %v1375 = vtanh.pop %v1374
    %v1376 = vmul.f32 %v1370, %v1375
    %s1377 = scalar_lea.vmem [#allocation9], 48
    %1378 = vst [vmem:[%s1377] sm:$0xff] %v1376
    %v1379 = vpack.c.bf16 %v1376, %v1376
    %s1380 = smul.u32 7, 4
    %s1381 = smul.addr %s1380, 8
    %s1382 = scalar_lea.vmem [#allocation2], %s1381
    %v1383 = vld [vmem:[%s1382] sm:$0xff]
    %v1384 = vld [vmem:[%s1382 + $0x8] sm:$0xff]
    %v1385 = vld [vmem:[%s1382 + $0x10] sm:$0xff]
    %v1386 = vld [vmem:[%s1382 + $0x18] sm:$0xff]
    %1387 = vmatprep.subr.bf16.mxu0 %v513
    %1388 = vmatpush1.bf16.msra.mxu0 %v512
    %1389 = vmatprep.subr.bf16.mxu0 %v509
    %1390 = vmatpush1.bf16.msra.mxu0 %v508
    %1391 = vmatprep.subr.bf16.mxu0 %v505
    %1392 = vmatpush1.bf16.msra.mxu0 %v504
    %1393 = vmatprep.subr.bf16.mxu0 %v501
    %1394 = vmatpush1.bf16.msra.mxu0 %v500
    %1395 = vmatprep.subr.bf16.mxu0 %v497
    %1396 = vmatpush1.bf16.msra.mxu0 %v496
    %1397 = vmatprep.subr.bf16.mxu0 %v493
    %1398 = vmatpush1.bf16.msra.mxu0 %v492
    %1399 = vmatprep.subr.bf16.mxu0 %v489
    %1400 = vmatpush1.bf16.msra.mxu0 %v488
    %1401 = vmatprep.subr.bf16.mxu0 %v485
    %1402 = vmatpush1.bf16.msra.mxu0 %v484
    %1403 = vmatprep.subr.bf16.mxu0 0
    %1404 = vmatpush2.bf16.msra.mxu0 0
    %1405 = vmatprep.subr.bf16.mxu0 0
    %1406 = vmatpush2.bf16.msra.mxu0 0
    %1407 = vmatprep.subr.bf16.mxu0 0
    %1408 = vmatpush2.bf16.msra.mxu0 0
    %1409 = vmatprep.subr.bf16.mxu0 0
    %1410 = vmatpush2.bf16.msra.mxu0 0
    %1411 = vmatprep.subr.bf16.mxu0 0
    %1412 = vmatpush2.bf16.msra.mxu0 0
    %1413 = vmatprep.subr.bf16.mxu0 0
    %1414 = vmatpush2.bf16.msra.mxu0 0
    %1415 = vmatprep.subr.bf16.mxu0 0
    %1416 = vmatpush2.bf16.msra.mxu0 0
    %1417 = vmatprep.subr.bf16.mxu0 0
    %1418 = vmatpush2.bf16.msra.mxu0 0
    %1419 = vmatprep.mubr.bf16.mxu0 0
    %1420 = vmatmul.mubr.bf16.gmra.mxu0 %v1379
    %v1421 = vpop.f32.mrf.mxu0
    %v1422 = vadd.f32 0.0, %v1421
    %v1423 = vpop.f32.mrf.mxu0
    %v1424 = vadd.f32 0.0, %v1423
    %v1425 = vpop.f32.mrf.mxu0
    %v1426 = vpop.f32.mrf.mxu0
    %1427 = vdwg.mxu0
    %1428 = vmatprep.subr.bf16.mxu0 %v515
    %1429 = vmatpush1.bf16.msra.mxu0 %v514
    %1430 = vmatprep.subr.bf16.mxu0 %v511
    %1431 = vmatpush1.bf16.msra.mxu0 %v510
    %1432 = vmatprep.subr.bf16.mxu0 %v507
    %1433 = vmatpush1.bf16.msra.mxu0 %v506
    %1434 = vmatprep.subr.bf16.mxu0 %v503
    %1435 = vmatpush1.bf16.msra.mxu0 %v502
    %1436 = vmatprep.subr.bf16.mxu0 %v499
    %1437 = vmatpush1.bf16.msra.mxu0 %v498
    %1438 = vmatprep.subr.bf16.mxu0 %v495
    %1439 = vmatpush1.bf16.msra.mxu0 %v494
    %1440 = vmatprep.subr.bf16.mxu0 %v491
    %1441 = vmatpush1.bf16.msra.mxu0 %v490
    %1442 = vmatprep.subr.bf16.mxu0 %v487
    %1443 = vmatpush1.bf16.msra.mxu0 %v486
    %1444 = vmatprep.subr.bf16.mxu0 0
    %1445 = vmatpush2.bf16.msra.mxu0 0
    %1446 = vmatprep.subr.bf16.mxu0 0
    %1447 = vmatpush2.bf16.msra.mxu0 0
    %1448 = vmatprep.subr.bf16.mxu0 0
    %1449 = vmatpush2.bf16.msra.mxu0 0
    %1450 = vmatprep.subr.bf16.mxu0 0
    %1451 = vmatpush2.bf16.msra.mxu0 0
    %1452 = vmatprep.subr.bf16.mxu0 0
    %1453 = vmatpush2.bf16.msra.mxu0 0
    %1454 = vmatprep.subr.bf16.mxu0 0
    %1455 = vmatpush2.bf16.msra.mxu0 0
    %1456 = vmatprep.subr.bf16.mxu0 0
    %1457 = vmatpush2.bf16.msra.mxu0 0
    %1458 = vmatprep.subr.bf16.mxu0 0
    %1459 = vmatpush2.bf16.msra.mxu0 0
    %1460 = vmatprep.mubr.bf16.mxu0 0
    %1461 = vmatmul.mubr.bf16.gmra.mxu0 %v1379
    %v1462 = vpop.f32.mrf.mxu0
    %v1463 = vadd.f32 0.0, %v1462
    %v1464 = vpop.f32.mrf.mxu0
    %v1465 = vadd.f32 0.0, %v1464
    %v1466 = vpop.f32.mrf.mxu0
    %v1467 = vpop.f32.mrf.mxu0
    %1468 = vdwg.mxu0
    %v1469 = vadd.f32 %v1383, %v1422
    %v1470 = vadd.f32 %v1384, %v1424
    %v1471 = vadd.f32 %v1385, %v1463
    %v1472 = vadd.f32 %v1386, %v1465
    %v1473 = vxor.u32 %v1469, 2147483648
    %v1474 = vxor.u32 %v1470, 2147483648
    %v1475 = vxor.u32 %v1471, 2147483648
    %v1476 = vmul.f32 %v1473, 1.442695
    %v1477 = vpow.pop %v1476
    %v1478 = vmul.f32 %v1474, 1.442695
    %v1479 = vpow.pop %v1478
    %v1480 = vmul.f32 %v1475, 1.442695
    %v1481 = vpow.pop %v1480
    %v1482 = vadd.f32 %v1477, 1.0
    %v1483 = vadd.f32 %v1479, 1.0
    %v1484 = vadd.f32 %v1481, 1.0
    %v1485 = vrcp.pop %v1482
    %v1486 = vmul.f32 1.0, %v1485
    %v1487 = vrcp.pop %v1483
    %v1488 = vmul.f32 1.0, %v1487
    %v1489 = vrcp.pop %v1484
    %v1490 = vmul.f32 1.0, %v1489
    %v1491 = vtanh.pop %v1472
    %v1492 = vmul.f32 %v1488, %v1374
    %v1493 = vmul.f32 %v1486, %v1491
    %v1494 = vadd.f32 %v1492, %v1493
    %v1495 = vtanh.pop %v1494
    %v1496 = vmul.f32 %v1490, %v1495
    %s1497 = scalar_lea.vmem [#allocation9], 56
    %1498 = vst [vmem:[%s1497] sm:$0xff] %v1496
    // Predicated region
    $region30: #{tpu_custom_call.1} parent=1 // pred_check
      _
    $region31: #{tpu_custom_call.1} parent=1 // pred_check_branch
      %1500 = sbr.rel (0) target = $region33
    $region32: #{tpu_custom_call.1} parent=1 // pred_region
      %s1502 = ssub.s32 1024, 1024
      %1503 = vsyncadd [#allocation5], %s1502
      %s1504 = sshll.u32 [#allocation9], 4
      %s1505 = int_to_ptr.vmem [resolvable:$true] %s1504
      %1510 = dma.vmem_to_hbm [thread:$0]  %s1505, 1024, %s4, [#allocation5], 128, 128, 8
    $region33: #{tpu_custom_call.1} parent=1 // pred_fallthru
      _
    // Predicated region
    $region34: #{tpu_custom_call.1} parent=1 // pred_check
      _
    $region35: #{tpu_custom_call.1} parent=1 // pred_check_branch
      %1512 = sbr.rel (0) target = $region37
    $region36: #{tpu_custom_call.1} parent=1 // pred_region
      %1513 = dma.done [#allocation5], 1024
    $region37: #{tpu_custom_call.1} parent=1 // pred_fallthru
      _
    %1514 = vsyncpa [#allocation4], 1
    %1515 = vsyncpa [#allocation7], 1
    %1516 = vsyncpa [#allocation5], 1

</llo_original>
